<compile_context>
chip_gen: v6e
topology: v6e:2x2x1
jax: 0.10.0
libtpu: 0.0.40
codegen_flags: <defaults>
</compile_context>

<pallas_src>
import functools
from typing import Optional, Tuple, Union

import jax
import jax.numpy as jnp
import numpy as np
from jax import lax
from jax.experimental import pallas as pl
from jax.experimental.pallas import tpu as pltpu

IntOrPair = Union[int, Tuple[int, int]]


def force_pair(v: IntOrPair) -> Tuple[int, int]:
    if isinstance(v, tuple):
        if len(v) != 2:
            raise ValueError(v)
        return (int(v[0]), int(v[1]))
    elif isinstance(v, int):
        return (v, v)
    raise ValueError(v)


def _cdiv(a: int, b: int) -> int:
    return -(-a // b)


def _conv_t_kernel(x_ref, w_ref, o_ref, lhs_ref, *,
                   WH: int, WW: int, col_base: int,
                   A_blk: int, Bw: int, Cin: int, P: int):
    """One (batch, row-block) grid step.

    x_ref:   (1, A_blk + WH - 1, Wp, Cin)  halo'd input rows (VMEM)
    w_ref:   (WH*WW*Cin, P)                fused sub-pixel weight (resident)
    o_ref:   (1, A_blk, Bw*P)              lane-dense output tile
    lhs_ref: (A_blk*Bw, WH*WW*Cin)         VMEM scratch: im2col LHS
    """
    # --- im2col over the fused sub-pixel window ---------------------------
    # Every (wy, wx) window tap contributes Cin contraction columns.
    for wy in range(WH):
        for wx in range(WW):
            k0 = (wy * WW + wx) * Cin
            sl = x_ref[0, wy:wy + A_blk,
                       col_base + wx:col_base + wx + Bw, :]      # (A_blk, Bw, Cin)
            lhs_ref[:, k0:k0 + Cin] = sl.reshape(A_blk * Bw, Cin)

    # --- single fused matmul: all taps and all sh*sw phases at once -------
    acc = jnp.dot(lhs_ref[...], w_ref[...],
                  preferred_element_type=jnp.float32)            # (A_blk*Bw, P)
    acc = acc.reshape(A_blk, Bw, P).astype(o_ref.dtype)

    # --- assemble the lane-dense (A_blk, Bw*P) output tile -----------------
    # Column b of the coarse grid goes to lanes [b*P, (b+1)*P).
    # TODO(synk): for very wide outputs (large Bw) this unrolled assembly loop
    # should be replaced by an additional column-block grid axis.
    for b in range(Bw):
        o_ref[0, :, b * P:(b + 1) * P] = acc[:, b, :]


def conv_transpose2d_pallas(x, weight, stride: IntOrPair = 1,
                            padding: IntOrPair = 0,
                            block_rows: Optional[int] = None):
    """x: (B, Cin, H, W) NCHW, weight: (Cin, Cout, kH, kW).  Returns NCHW."""
    sh, sw = force_pair(stride)
    ph, pw = force_pair(padding)
    B, Cin, H, W = x.shape
    Cin_w, Cout, kH, kW = weight.shape
    assert Cin == Cin_w

    pht = kH - 1 - ph
    pwt = kW - 1 - pw
    # TODO(synk): padding > kernel_size - 1 (negative effective pad) and
    # output_padding are not handled.
    assert pht >= 0 and pwt >= 0, "padding > kernel_size - 1 unsupported"

    Ho = (H - 1) * sh + kH - 2 * ph
    Wo = (W - 1) * sw + kW - 2 * pw

    # ---- sub-pixel (phase) decomposition bookkeeping (static ints) ---------
    KHs, KWs = _cdiv(kH, sh), _cdiv(kW, sw)              # taps per phase
    p0 = [(pht - ry) % sh for ry in range(sh)]
    q0 = [(pwt - rx) % sw for rx in range(sw)]
    oy = [(ry + p0[ry] - pht) // sh for ry in range(sh)]  # exact division
    ox = [(rx + q0[rx] - pwt) // sw for rx in range(sw)]
    oy_min, ox_min = min(oy), min(ox)
    WH = KHs + (max(oy) - oy_min)                        # union window height
    WW = KWs + (max(ox) - ox_min)                        # union window width

    A = _cdiv(Ho, sh)          # coarse output rows (per phase)
    Bw = _cdiv(Wo, sw)         # coarse output cols (per phase)
    P = sh * sw * Cout         # per-coarse-pixel output payload (phases*chan)
    K = WH * WW * Cin          # fused contraction size

    # Row-block size -> bounded VMEM per grid step (~1 MiB output tile).
    if block_rows is None:
        block_rows = max(8, (1 << 20) // (4 * Bw * P))
    A_blk = max(1, min(A, int(block_rows)))
    n_blk = _cdiv(A, A_blk)
    A_pad = n_blk * A_blk

    # ---- fused sub-pixel weight: (WH*WW*Cin, sh*sw*Cout) -------------------
    # w_k[(wy*WW+wx)*Cin + ci, (ry*sw+rx)*Cout + co] = weight[ci, co, kH-1-p, kW-1-q]
    # for the tap (p, q) that phase (ry, rx) maps to window slot (wy, wx);
    # zero where a phase has no tap at that slot.
    Pi = np.zeros((WH, sh), np.int32)
    My = np.zeros((WH, sh), bool)
    for ry in range(sh):
        dy = oy[ry] - oy_min
        for m in range(KHs):
            p = p0[ry] + m * sh
            if p < kH:
                Pi[m + dy, ry] = p
                My[m + dy, ry] = True
    Qi = np.zeros((WW, sw), np.int32)
    Mx = np.zeros((WW, sw), bool)
    for rx in range(sw):
        dx = ox[rx] - ox_min
        for n in range(KWs):
            q = q0[rx] + n * sw
            if q < kW:
                Qi[n + dx, rx] = q
                Mx[n + dx, rx] = True

    wf = weight[:, :, ::-1, ::-1]                                   # flipped taps
    w_big = wf[:, :, Pi[:, None, :, None], Qi[None, :, None, :]]    # (Cin,Cout,WH,WW,sh,sw)
    mask = jnp.asarray(My[:, None, :, None] & Mx[None, :, None, :], wf.dtype)
    w_big = w_big * mask[None, None]
    w_k = jnp.transpose(w_big, (2, 3, 0, 4, 5, 1)).reshape(K, P)

    # ---- small halo pad of the ORIGINAL input (no zero-upsampling!) --------
    pad_top = max(0, -oy_min)
    pad_left = max(0, -ox_min)
    pad_bot = max(0, A_pad + WH - 1 + oy_min - H)
    pad_right = max(0, Bw + WW - 1 + ox_min - W)
    row_base = oy_min + pad_top        # >= 0
    col_base = ox_min + pad_left       # >= 0

    x_nhwc = jnp.transpose(x, (0, 2, 3, 1))                         # (B,H,W,Cin)
    x_p = jnp.pad(x_nhwc, ((0, 0), (pad_top, pad_bot),
                           (pad_left, pad_right), (0, 0)))
    Wp = W + pad_left + pad_right

    # Overlapping row windows (halo = WH-1 rows) so row blocks are independent.
    rows_blk = A_blk + WH - 1
    ridx = (np.arange(n_blk, dtype=np.int32)[:, None] * A_blk
            + np.arange(rows_blk, dtype=np.int32)[None, :] + row_base)
    x_blocks = x_p[:, ridx].reshape(B * n_blk, rows_blk, Wp, Cin)

    kernel = functools.partial(_conv_t_kernel, WH=WH, WW=WW, col_base=col_base,
                               A_blk=A_blk, Bw=Bw, Cin=Cin, P=P)

    blk_bytes = 4 * (rows_blk * Wp * Cin          # input block
                     + 2 * A_blk * Bw * P         # output block + acc temp
                     + K * P                      # weight
                     + A_blk * Bw * K)            # im2col scratch
    vmem_limit = int(min(max(8 * blk_bytes, 16 * 1024 * 1024), 48 * 1024 * 1024))

    out_blocks = pl.pallas_call(
        kernel,
        out_shape=jax.ShapeDtypeStruct((B * n_blk, A_blk, Bw * P), x.dtype),
        grid_spec=pltpu.PrefetchScalarGridSpec(
            num_scalar_prefetch=0,
            grid=(B, n_blk),
            in_specs=[
                pl.BlockSpec((1, rows_blk, Wp, Cin),
                             lambda b, i: (b * n_blk + i, 0, 0, 0)),
                pl.BlockSpec((K, P), lambda b, i: (0, 0)),
            ],
            out_specs=pl.BlockSpec((1, A_blk, Bw * P),
                                   lambda b, i: (b * n_blk + i, 0, 0)),
            scratch_shapes=[pltpu.VMEM((A_blk * Bw, K), x.dtype)],
        ),
        compiler_params=pltpu.CompilerParams(
            dimension_semantics=("parallel", "parallel"),
            vmem_limit_bytes=vmem_limit),
    )(x_blocks, w_k)

    # ---- pixel-shuffle the sh*sw phases back into the spatial grid ---------
    out = out_blocks.reshape(B, A_pad, Bw, sh, sw, Cout)
    out = jnp.transpose(out, (0, 1, 3, 2, 4, 5)).reshape(B, A_pad * sh, Bw * sw, Cout)
    out = out[:, :Ho, :Wo, :]
    return jnp.transpose(out, (0, 3, 1, 2))                         # NCHW


class ConvTranspose2dPallas:
    """Mirror of the PyTorch ConvTranspose2d module (bias=False)."""

    def __init__(self, in_channels: int, out_channels: int,
                 kernel_size: IntOrPair, stride: IntOrPair = 1,
                 padding: IntOrPair = 0, *, key=None):
        self.in_channels = in_channels
        self.out_channels = out_channels
        self.kernel_size = force_pair(kernel_size)
        self.stride = force_pair(stride)
        self.padding = force_pair(padding)
        sqrt_k = (1.0 / (out_channels * self.kernel_size[0]
                         * self.kernel_size[1])) ** 0.5
        if key is None:
            key = jax.random.PRNGKey(0)
        self.weight = jax.random.uniform(
            key, (in_channels, out_channels, *self.kernel_size),
            dtype=jnp.float32, minval=-sqrt_k, maxval=sqrt_k)

    def __call__(self, x, block_rows: Optional[int] = None):
        return conv_transpose2d_pallas(x, self.weight,
                                       stride=self.stride,
                                       padding=self.padding,
                                       block_rows=block_rows)


def _reference_conv_transpose2d(x, weight, stride, padding):
    """Independent reference via lax.conv_general_dilated (lhs dilation)."""
    sh, sw = force_pair(stride)
    ph, pw = force_pair(padding)
    kH, kW = weight.shape[2], weight.shape[3]
    w_conv = jnp.transpose(jnp.flip(weight, (2, 3)), (1, 0, 2, 3))  # (Cout,Cin,kH,kW)
    return lax.conv_general_dilated(
        x, w_conv, window_strides=(1, 1),
        padding=[(kH - 1 - ph, kH - 1 - ph), (kW - 1 - pw, kW - 1 - pw)],
        lhs_dilation=(sh, sw),
        dimension_numbers=("NCHW", "OIHW", "NCHW"))


if __name__ == "__main__":
    key = jax.random.PRNGKey(0)
    k_x, k_w = jax.random.split(key)

    B, Cin, H, W = 2, 4, 16, 16
    Cout, ksize, stride, padding = 8, 4, 2, 1   # DCGAN-style upsampling conv

    x = jax.random.normal(k_x, (B, Cin, H, W), dtype=jnp.float32)

    module = ConvTranspose2dPallas(Cin, Cout, ksize, stride=stride,
                                   padding=padding, key=k_w)

    # block_rows=8 -> two output-row blocks per image: grid = (batch=2, rows=2).
    out = module(x, block_rows=8)
    out = jax.block_until_ready(out)

    ref = _reference_conv_transpose2d(x, module.weight, stride, padding)
    assert out.shape == ref.shape == (B, Cout, 32, 32), (out.shape, ref.shape)
    assert np.allclose(np.asarray(out), np.asarray(ref), atol=1e-4, rtol=1e-4)

    print("KERNEL_OK")
</pallas_src>

<mosaic_0001>
module attributes {stable_mosaic.version = 11 : i64} {
  func.func @_conv_t_kernel(%arg0: i32, %arg1: i32, %arg2: memref<1x10x18x4xf32, #tpu.memory_space<vmem>>, %arg3: memref<36x32xf32, #tpu.memory_space<vmem>>, %arg4: memref<1x8x512xf32, #tpu.memory_space<vmem>>, %arg5: memref<128x36xf32, #tpu.memory_space<vmem>>) attributes {dimension_semantics = [#tpu.dimension_semantics<parallel>, #tpu.dimension_semantics<parallel>], iteration_bounds = array<i64: 2, 2>, scalar_prefetch = 0 : i64, scratch_operands = 1 : i64, tpu.core_type = #tpu.core_type<tc>, window_params = [{transform_indices = @transform_0, window_bounds = array<i64: 1, 10, 18, 4>}, {pipeline_mode = #tpu.pipeline_mode<synchronous>, transform_indices = @transform_1, window_bounds = array<i64: 36, 32>}, {transform_indices = @transform_2, window_bounds = array<i64: 1, 8, 512>}]} {
    %c0 = arith.constant 0 : index
    %c0_0 = arith.constant 0 : index
    %c0_1 = arith.constant 0 : index
    %c0_2 = arith.constant 0 : index
    %0 = vector.load %arg2[%c0, %c0_0, %c0_1, %c0_2] : memref<1x10x18x4xf32, #tpu.memory_space<vmem>>, vector<1x8x16x4xf32>
    %1 = vector.shape_cast %0 : vector<1x8x16x4xf32> to vector<8x16x4xf32>
    %2 = vector.shape_cast %1 : vector<8x16x4xf32> to vector<128x4xf32>
    %c0_3 = arith.constant 0 : index
    %c0_4 = arith.constant 0 : index
    %3 = vector.load %arg5[%c0_3, %c0_4] : memref<128x36xf32, #tpu.memory_space<vmem>>, vector<128x4xf32>
    tpu.vector_store %arg5[%c0_3, %c0_4], %2 {strides = array<i32>} : memref<128x36xf32, #tpu.memory_space<vmem>>, vector<128x4xf32>,
    %c0_5 = arith.constant 0 : index
    %c0_6 = arith.constant 0 : index
    %c1 = arith.constant 1 : index
    %c0_7 = arith.constant 0 : index
    %4 = vector.load %arg2[%c0_5, %c0_6, %c1, %c0_7] : memref<1x10x18x4xf32, #tpu.memory_space<vmem>>, vector<1x8x16x4xf32>
    %5 = vector.shape_cast %4 : vector<1x8x16x4xf32> to vector<8x16x4xf32>
    %6 = vector.shape_cast %5 : vector<8x16x4xf32> to vector<128x4xf32>
    %c0_8 = arith.constant 0 : index
    %c4 = arith.constant 4 : index
    %7 = vector.load %arg5[%c0_8, %c4] : memref<128x36xf32, #tpu.memory_space<vmem>>, vector<128x4xf32>
    tpu.vector_store %arg5[%c0_8, %c4], %6 {strides = array<i32>} : memref<128x36xf32, #tpu.memory_space<vmem>>, vector<128x4xf32>,
    %c0_9 = arith.constant 0 : index
    %c0_10 = arith.constant 0 : index
    %c2 = arith.constant 2 : index
    %c0_11 = arith.constant 0 : index
    %8 = vector.load %arg2[%c0_9, %c0_10, %c2, %c0_11] : memref<1x10x18x4xf32, #tpu.memory_space<vmem>>, vector<1x8x16x4xf32>
    %9 = vector.shape_cast %8 : vector<1x8x16x4xf32> to vector<8x16x4xf32>
    %10 = vector.shape_cast %9 : vector<8x16x4xf32> to vector<128x4xf32>
    %c0_12 = arith.constant 0 : index
    %c8 = arith.constant 8 : index
    %11 = vector.load %arg5[%c0_12, %c8] : memref<128x36xf32, #tpu.memory_space<vmem>>, vector<128x4xf32>
    tpu.vector_store %arg5[%c0_12, %c8], %10 {strides = array<i32>} : memref<128x36xf32, #tpu.memory_space<vmem>>, vector<128x4xf32>,
    %c0_13 = arith.constant 0 : index
    %c1_14 = arith.constant 1 : index
    %c0_15 = arith.constant 0 : index
    %c0_16 = arith.constant 0 : index
    %12 = vector.load %arg2[%c0_13, %c1_14, %c0_15, %c0_16] : memref<1x10x18x4xf32, #tpu.memory_space<vmem>>, vector<1x8x16x4xf32>
    %13 = vector.shape_cast %12 : vector<1x8x16x4xf32> to vector<8x16x4xf32>
    %14 = vector.shape_cast %13 : vector<8x16x4xf32> to vector<128x4xf32>
    %c0_17 = arith.constant 0 : index
    %c12 = arith.constant 12 : index
    %15 = vector.load %arg5[%c0_17, %c12] : memref<128x36xf32, #tpu.memory_space<vmem>>, vector<128x4xf32>
    tpu.vector_store %arg5[%c0_17, %c12], %14 {strides = array<i32>} : memref<128x36xf32, #tpu.memory_space<vmem>>, vector<128x4xf32>,
    %c0_18 = arith.constant 0 : index
    %c1_19 = arith.constant 1 : index
    %c1_20 = arith.constant 1 : index
    %c0_21 = arith.constant 0 : index
    %16 = vector.load %arg2[%c0_18, %c1_19, %c1_20, %c0_21] : memref<1x10x18x4xf32, #tpu.memory_space<vmem>>, vector<1x8x16x4xf32>
    %17 = vector.shape_cast %16 : vector<1x8x16x4xf32> to vector<8x16x4xf32>
    %18 = vector.shape_cast %17 : vector<8x16x4xf32> to vector<128x4xf32>
    %c0_22 = arith.constant 0 : index
    %c16 = arith.constant 16 : index
    %19 = vector.load %arg5[%c0_22, %c16] : memref<128x36xf32, #tpu.memory_space<vmem>>, vector<128x4xf32>
    tpu.vector_store %arg5[%c0_22, %c16], %18 {strides = array<i32>} : memref<128x36xf32, #tpu.memory_space<vmem>>, vector<128x4xf32>,
    %c0_23 = arith.constant 0 : index
    %c1_24 = arith.constant 1 : index
    %c2_25 = arith.constant 2 : index
    %c0_26 = arith.constant 0 : index
    %20 = vector.load %arg2[%c0_23, %c1_24, %c2_25, %c0_26] : memref<1x10x18x4xf32, #tpu.memory_space<vmem>>, vector<1x8x16x4xf32>
    %21 = vector.shape_cast %20 : vector<1x8x16x4xf32> to vector<8x16x4xf32>
    %22 = vector.shape_cast %21 : vector<8x16x4xf32> to vector<128x4xf32>
    %c0_27 = arith.constant 0 : index
    %c20 = arith.constant 20 : index
    %23 = vector.load %arg5[%c0_27, %c20] : memref<128x36xf32, #tpu.memory_space<vmem>>, vector<128x4xf32>
    tpu.vector_store %arg5[%c0_27, %c20], %22 {strides = array<i32>} : memref<128x36xf32, #tpu.memory_space<vmem>>, vector<128x4xf32>,
    %c0_28 = arith.constant 0 : index
    %c2_29 = arith.constant 2 : index
    %c0_30 = arith.constant 0 : index
    %c0_31 = arith.constant 0 : index
    %24 = vector.load %arg2[%c0_28, %c2_29, %c0_30, %c0_31] : memref<1x10x18x4xf32, #tpu.memory_space<vmem>>, vector<1x8x16x4xf32>
    %25 = vector.shape_cast %24 : vector<1x8x16x4xf32> to vector<8x16x4xf32>
    %26 = vector.shape_cast %25 : vector<8x16x4xf32> to vector<128x4xf32>
    %c0_32 = arith.constant 0 : index
    %c24 = arith.constant 24 : index
    %27 = vector.load %arg5[%c0_32, %c24] : memref<128x36xf32, #tpu.memory_space<vmem>>, vector<128x4xf32>
    tpu.vector_store %arg5[%c0_32, %c24], %26 {strides = array<i32>} : memref<128x36xf32, #tpu.memory_space<vmem>>, vector<128x4xf32>,
    %c0_33 = arith.constant 0 : index
    %c2_34 = arith.constant 2 : index
    %c1_35 = arith.constant 1 : index
    %c0_36 = arith.constant 0 : index
    %28 = vector.load %arg2[%c0_33, %c2_34, %c1_35, %c0_36] : memref<1x10x18x4xf32, #tpu.memory_space<vmem>>, vector<1x8x16x4xf32>
    %29 = vector.shape_cast %28 : vector<1x8x16x4xf32> to vector<8x16x4xf32>
    %30 = vector.shape_cast %29 : vector<8x16x4xf32> to vector<128x4xf32>
    %c0_37 = arith.constant 0 : index
    %c28 = arith.constant 28 : index
    %31 = vector.load %arg5[%c0_37, %c28] : memref<128x36xf32, #tpu.memory_space<vmem>>, vector<128x4xf32>
    tpu.vector_store %arg5[%c0_37, %c28], %30 {strides = array<i32>} : memref<128x36xf32, #tpu.memory_space<vmem>>, vector<128x4xf32>,
    %c0_38 = arith.constant 0 : index
    %c2_39 = arith.constant 2 : index
    %c2_40 = arith.constant 2 : index
    %c0_41 = arith.constant 0 : index
    %32 = vector.load %arg2[%c0_38, %c2_39, %c2_40, %c0_41] : memref<1x10x18x4xf32, #tpu.memory_space<vmem>>, vector<1x8x16x4xf32>
    %33 = vector.shape_cast %32 : vector<1x8x16x4xf32> to vector<8x16x4xf32>
    %34 = vector.shape_cast %33 : vector<8x16x4xf32> to vector<128x4xf32>
    %c0_42 = arith.constant 0 : index
    %c32 = arith.constant 32 : index
    %35 = vector.load %arg5[%c0_42, %c32] : memref<128x36xf32, #tpu.memory_space<vmem>>, vector<128x4xf32>
    tpu.vector_store %arg5[%c0_42, %c32], %34 {strides = array<i32>} : memref<128x36xf32, #tpu.memory_space<vmem>>, vector<128x4xf32>,
    %c0_43 = arith.constant 0 : index
    %c0_44 = arith.constant 0 : index
    %36 = vector.load %arg5[%c0_43, %c0_44] : memref<128x36xf32, #tpu.memory_space<vmem>>, vector<128x36xf32>
    %c0_45 = arith.constant 0 : index
    %c0_46 = arith.constant 0 : index
    %37 = vector.load %arg3[%c0_45, %c0_46] : memref<36x32xf32, #tpu.memory_space<vmem>>, vector<36x32xf32>
    %cst = arith.constant dense<0.000000e+00> : vector<128x32xf32>
    %38 = tpu.matmul %36, %37, %cst {dimension_numbers = #tpu.dot_dimension_numbers<[1], [0], [0], [1], [0, 0, 1, 1], [], []>} : vector<128x36xf32>, vector<36x32xf32>, vector<128x32xf32> -> vector<128x32xf32>
    %39 = vector.shape_cast %38 : vector<128x32xf32> to vector<8x16x32xf32>
    %40 = vector.extract_strided_slice %39 {offsets = [0, 0, 0], sizes = [8, 1, 32], strides = [1, 1, 1]} : vector<8x16x32xf32> to vector<8x1x32xf32>
    %41 = vector.shape_cast %40 : vector<8x1x32xf32> to vector<8x32xf32>
    %c0_47 = arith.constant 0 : index
    %c0_48 = arith.constant 0 : index
    %c0_49 = arith.constant 0 : index
    %42 = vector.load %arg4[%c0_47, %c0_48, %c0_49] : memref<1x8x512xf32, #tpu.memory_space<vmem>>, vector<1x8x32xf32>
    %43 = vector.shape_cast %42 : vector<1x8x32xf32> to vector<8x32xf32>
    %44 = vector.shape_cast %41 : vector<8x32xf32> to vector<1x8x32xf32>
    tpu.vector_store %arg4[%c0_47, %c0_48, %c0_49], %44 {strides = array<i32>} : memref<1x8x512xf32, #tpu.memory_space<vmem>>, vector<1x8x32xf32>,
    %45 = vector.extract_strided_slice %39 {offsets = [0, 1, 0], sizes = [8, 1, 32], strides = [1, 1, 1]} : vector<8x16x32xf32> to vector<8x1x32xf32>
    %46 = vector.shape_cast %45 : vector<8x1x32xf32> to vector<8x32xf32>
    %c0_50 = arith.constant 0 : index
    %c0_51 = arith.constant 0 : index
    %c32_52 = arith.constant 32 : index
    %47 = vector.load %arg4[%c0_50, %c0_51, %c32_52] : memref<1x8x512xf32, #tpu.memory_space<vmem>>, vector<1x8x32xf32>
    %48 = vector.shape_cast %47 : vector<1x8x32xf32> to vector<8x32xf32>
    %49 = vector.shape_cast %46 : vector<8x32xf32> to vector<1x8x32xf32>
    tpu.vector_store %arg4[%c0_50, %c0_51, %c32_52], %49 {strides = array<i32>} : memref<1x8x512xf32, #tpu.memory_space<vmem>>, vector<1x8x32xf32>,
    %50 = vector.extract_strided_slice %39 {offsets = [0, 2, 0], sizes = [8, 1, 32], strides = [1, 1, 1]} : vector<8x16x32xf32> to vector<8x1x32xf32>
    %51 = vector.shape_cast %50 : vector<8x1x32xf32> to vector<8x32xf32>
    %c0_53 = arith.constant 0 : index
    %c0_54 = arith.constant 0 : index
    %c64 = arith.constant 64 : index
    %52 = vector.load %arg4[%c0_53, %c0_54, %c64] : memref<1x8x512xf32, #tpu.memory_space<vmem>>, vector<1x8x32xf32>
    %53 = vector.shape_cast %52 : vector<1x8x32xf32> to vector<8x32xf32>
    %54 = vector.shape_cast %51 : vector<8x32xf32> to vector<1x8x32xf32>
    tpu.vector_store %arg4[%c0_53, %c0_54, %c64], %54 {strides = array<i32>} : memref<1x8x512xf32, #tpu.memory_space<vmem>>, vector<1x8x32xf32>,
    %55 = vector.extract_strided_slice %39 {offsets = [0, 3, 0], sizes = [8, 1, 32], strides = [1, 1, 1]} : vector<8x16x32xf32> to vector<8x1x32xf32>
    %56 = vector.shape_cast %55 : vector<8x1x32xf32> to vector<8x32xf32>
    %c0_55 = arith.constant 0 : index
    %c0_56 = arith.constant 0 : index
    %c96 = arith.constant 96 : index
    %57 = vector.load %arg4[%c0_55, %c0_56, %c96] : memref<1x8x512xf32, #tpu.memory_space<vmem>>, vector<1x8x32xf32>
    %58 = vector.shape_cast %57 : vector<1x8x32xf32> to vector<8x32xf32>
    %59 = vector.shape_cast %56 : vector<8x32xf32> to vector<1x8x32xf32>
    tpu.vector_store %arg4[%c0_55, %c0_56, %c96], %59 {strides = array<i32>} : memref<1x8x512xf32, #tpu.memory_space<vmem>>, vector<1x8x32xf32>,
    %60 = vector.extract_strided_slice %39 {offsets = [0, 4, 0], sizes = [8, 1, 32], strides = [1, 1, 1]} : vector<8x16x32xf32> to vector<8x1x32xf32>
    %61 = vector.shape_cast %60 : vector<8x1x32xf32> to vector<8x32xf32>
    %c0_57 = arith.constant 0 : index
    %c0_58 = arith.constant 0 : index
    %c128 = arith.constant 128 : index
    %62 = vector.load %arg4[%c0_57, %c0_58, %c128] : memref<1x8x512xf32, #tpu.memory_space<vmem>>, vector<1x8x32xf32>
    %63 = vector.shape_cast %62 : vector<1x8x32xf32> to vector<8x32xf32>
    %64 = vector.shape_cast %61 : vector<8x32xf32> to vector<1x8x32xf32>
    tpu.vector_store %arg4[%c0_57, %c0_58, %c128], %64 {strides = array<i32>} : memref<1x8x512xf32, #tpu.memory_space<vmem>>, vector<1x8x32xf32>,
    %65 = vector.extract_strided_slice %39 {offsets = [0, 5, 0], sizes = [8, 1, 32], strides = [1, 1, 1]} : vector<8x16x32xf32> to vector<8x1x32xf32>
    %66 = vector.shape_cast %65 : vector<8x1x32xf32> to vector<8x32xf32>
    %c0_59 = arith.constant 0 : index
    %c0_60 = arith.constant 0 : index
    %c160 = arith.constant 160 : index
    %67 = vector.load %arg4[%c0_59, %c0_60, %c160] : memref<1x8x512xf32, #tpu.memory_space<vmem>>, vector<1x8x32xf32>
    %68 = vector.shape_cast %67 : vector<1x8x32xf32> to vector<8x32xf32>
    %69 = vector.shape_cast %66 : vector<8x32xf32> to vector<1x8x32xf32>
    tpu.vector_store %arg4[%c0_59, %c0_60, %c160], %69 {strides = array<i32>} : memref<1x8x512xf32, #tpu.memory_space<vmem>>, vector<1x8x32xf32>,
    %70 = vector.extract_strided_slice %39 {offsets = [0, 6, 0], sizes = [8, 1, 32], strides = [1, 1, 1]} : vector<8x16x32xf32> to vector<8x1x32xf32>
    %71 = vector.shape_cast %70 : vector<8x1x32xf32> to vector<8x32xf32>
    %c0_61 = arith.constant 0 : index
    %c0_62 = arith.constant 0 : index
    %c192 = arith.constant 192 : index
    %72 = vector.load %arg4[%c0_61, %c0_62, %c192] : memref<1x8x512xf32, #tpu.memory_space<vmem>>, vector<1x8x32xf32>
    %73 = vector.shape_cast %72 : vector<1x8x32xf32> to vector<8x32xf32>
    %74 = vector.shape_cast %71 : vector<8x32xf32> to vector<1x8x32xf32>
    tpu.vector_store %arg4[%c0_61, %c0_62, %c192], %74 {strides = array<i32>} : memref<1x8x512xf32, #tpu.memory_space<vmem>>, vector<1x8x32xf32>,
    %75 = vector.extract_strided_slice %39 {offsets = [0, 7, 0], sizes = [8, 1, 32], strides = [1, 1, 1]} : vector<8x16x32xf32> to vector<8x1x32xf32>
    %76 = vector.shape_cast %75 : vector<8x1x32xf32> to vector<8x32xf32>
    %c0_63 = arith.constant 0 : index
    %c0_64 = arith.constant 0 : index
    %c224 = arith.constant 224 : index
    %77 = vector.load %arg4[%c0_63, %c0_64, %c224] : memref<1x8x512xf32, #tpu.memory_space<vmem>>, vector<1x8x32xf32>
    %78 = vector.shape_cast %77 : vector<1x8x32xf32> to vector<8x32xf32>
    %79 = vector.shape_cast %76 : vector<8x32xf32> to vector<1x8x32xf32>
    tpu.vector_store %arg4[%c0_63, %c0_64, %c224], %79 {strides = array<i32>} : memref<1x8x512xf32, #tpu.memory_space<vmem>>, vector<1x8x32xf32>,
    %80 = vector.extract_strided_slice %39 {offsets = [0, 8, 0], sizes = [8, 1, 32], strides = [1, 1, 1]} : vector<8x16x32xf32> to vector<8x1x32xf32>
    %81 = vector.shape_cast %80 : vector<8x1x32xf32> to vector<8x32xf32>
    %c0_65 = arith.constant 0 : index
    %c0_66 = arith.constant 0 : index
    %c256 = arith.constant 256 : index
    %82 = vector.load %arg4[%c0_65, %c0_66, %c256] : memref<1x8x512xf32, #tpu.memory_space<vmem>>, vector<1x8x32xf32>
    %83 = vector.shape_cast %82 : vector<1x8x32xf32> to vector<8x32xf32>
    %84 = vector.shape_cast %81 : vector<8x32xf32> to vector<1x8x32xf32>
    tpu.vector_store %arg4[%c0_65, %c0_66, %c256], %84 {strides = array<i32>} : memref<1x8x512xf32, #tpu.memory_space<vmem>>, vector<1x8x32xf32>,
    %85 = vector.extract_strided_slice %39 {offsets = [0, 9, 0], sizes = [8, 1, 32], strides = [1, 1, 1]} : vector<8x16x32xf32> to vector<8x1x32xf32>
    %86 = vector.shape_cast %85 : vector<8x1x32xf32> to vector<8x32xf32>
    %c0_67 = arith.constant 0 : index
    %c0_68 = arith.constant 0 : index
    %c288 = arith.constant 288 : index
    %87 = vector.load %arg4[%c0_67, %c0_68, %c288] : memref<1x8x512xf32, #tpu.memory_space<vmem>>, vector<1x8x32xf32>
    %88 = vector.shape_cast %87 : vector<1x8x32xf32> to vector<8x32xf32>
    %89 = vector.shape_cast %86 : vector<8x32xf32> to vector<1x8x32xf32>
    tpu.vector_store %arg4[%c0_67, %c0_68, %c288], %89 {strides = array<i32>} : memref<1x8x512xf32, #tpu.memory_space<vmem>>, vector<1x8x32xf32>,
    %90 = vector.extract_strided_slice %39 {offsets = [0, 10, 0], sizes = [8, 1, 32], strides = [1, 1, 1]} : vector<8x16x32xf32> to vector<8x1x32xf32>
    %91 = vector.shape_cast %90 : vector<8x1x32xf32> to vector<8x32xf32>
    %c0_69 = arith.constant 0 : index
    %c0_70 = arith.constant 0 : index
    %c320 = arith.constant 320 : index
    %92 = vector.load %arg4[%c0_69, %c0_70, %c320] : memref<1x8x512xf32, #tpu.memory_space<vmem>>, vector<1x8x32xf32>
    %93 = vector.shape_cast %92 : vector<1x8x32xf32> to vector<8x32xf32>
    %94 = vector.shape_cast %91 : vector<8x32xf32> to vector<1x8x32xf32>
    tpu.vector_store %arg4[%c0_69, %c0_70, %c320], %94 {strides = array<i32>} : memref<1x8x512xf32, #tpu.memory_space<vmem>>, vector<1x8x32xf32>,
    %95 = vector.extract_strided_slice %39 {offsets = [0, 11, 0], sizes = [8, 1, 32], strides = [1, 1, 1]} : vector<8x16x32xf32> to vector<8x1x32xf32>
    %96 = vector.shape_cast %95 : vector<8x1x32xf32> to vector<8x32xf32>
    %c0_71 = arith.constant 0 : index
    %c0_72 = arith.constant 0 : index
    %c352 = arith.constant 352 : index
    %97 = vector.load %arg4[%c0_71, %c0_72, %c352] : memref<1x8x512xf32, #tpu.memory_space<vmem>>, vector<1x8x32xf32>
    %98 = vector.shape_cast %97 : vector<1x8x32xf32> to vector<8x32xf32>
    %99 = vector.shape_cast %96 : vector<8x32xf32> to vector<1x8x32xf32>
    tpu.vector_store %arg4[%c0_71, %c0_72, %c352], %99 {strides = array<i32>} : memref<1x8x512xf32, #tpu.memory_space<vmem>>, vector<1x8x32xf32>,
    %100 = vector.extract_strided_slice %39 {offsets = [0, 12, 0], sizes = [8, 1, 32], strides = [1, 1, 1]} : vector<8x16x32xf32> to vector<8x1x32xf32>
    %101 = vector.shape_cast %100 : vector<8x1x32xf32> to vector<8x32xf32>
    %c0_73 = arith.constant 0 : index
    %c0_74 = arith.constant 0 : index
    %c384 = arith.constant 384 : index
    %102 = vector.load %arg4[%c0_73, %c0_74, %c384] : memref<1x8x512xf32, #tpu.memory_space<vmem>>, vector<1x8x32xf32>
    %103 = vector.shape_cast %102 : vector<1x8x32xf32> to vector<8x32xf32>
    %104 = vector.shape_cast %101 : vector<8x32xf32> to vector<1x8x32xf32>
    tpu.vector_store %arg4[%c0_73, %c0_74, %c384], %104 {strides = array<i32>} : memref<1x8x512xf32, #tpu.memory_space<vmem>>, vector<1x8x32xf32>,
    %105 = vector.extract_strided_slice %39 {offsets = [0, 13, 0], sizes = [8, 1, 32], strides = [1, 1, 1]} : vector<8x16x32xf32> to vector<8x1x32xf32>
    %106 = vector.shape_cast %105 : vector<8x1x32xf32> to vector<8x32xf32>
    %c0_75 = arith.constant 0 : index
    %c0_76 = arith.constant 0 : index
    %c416 = arith.constant 416 : index
    %107 = vector.load %arg4[%c0_75, %c0_76, %c416] : memref<1x8x512xf32, #tpu.memory_space<vmem>>, vector<1x8x32xf32>
    %108 = vector.shape_cast %107 : vector<1x8x32xf32> to vector<8x32xf32>
    %109 = vector.shape_cast %106 : vector<8x32xf32> to vector<1x8x32xf32>
    tpu.vector_store %arg4[%c0_75, %c0_76, %c416], %109 {strides = array<i32>} : memref<1x8x512xf32, #tpu.memory_space<vmem>>, vector<1x8x32xf32>,
    %110 = vector.extract_strided_slice %39 {offsets = [0, 14, 0], sizes = [8, 1, 32], strides = [1, 1, 1]} : vector<8x16x32xf32> to vector<8x1x32xf32>
    %111 = vector.shape_cast %110 : vector<8x1x32xf32> to vector<8x32xf32>
    %c0_77 = arith.constant 0 : index
    %c0_78 = arith.constant 0 : index
    %c448 = arith.constant 448 : index
    %112 = vector.load %arg4[%c0_77, %c0_78, %c448] : memref<1x8x512xf32, #tpu.memory_space<vmem>>, vector<1x8x32xf32>
    %113 = vector.shape_cast %112 : vector<1x8x32xf32> to vector<8x32xf32>
    %114 = vector.shape_cast %111 : vector<8x32xf32> to vector<1x8x32xf32>
    tpu.vector_store %arg4[%c0_77, %c0_78, %c448], %114 {strides = array<i32>} : memref<1x8x512xf32, #tpu.memory_space<vmem>>, vector<1x8x32xf32>,
    %115 = vector.extract_strided_slice %39 {offsets = [0, 15, 0], sizes = [8, 1, 32], strides = [1, 1, 1]} : vector<8x16x32xf32> to vector<8x1x32xf32>
    %116 = vector.shape_cast %115 : vector<8x1x32xf32> to vector<8x32xf32>
    %c0_79 = arith.constant 0 : index
    %c0_80 = arith.constant 0 : index
    %c480 = arith.constant 480 : index
    %117 = vector.load %arg4[%c0_79, %c0_80, %c480] : memref<1x8x512xf32, #tpu.memory_space<vmem>>, vector<1x8x32xf32>
    %118 = vector.shape_cast %117 : vector<1x8x32xf32> to vector<8x32xf32>
    %119 = vector.shape_cast %116 : vector<8x32xf32> to vector<1x8x32xf32>
    tpu.vector_store %arg4[%c0_79, %c0_80, %c480], %119 {strides = array<i32>} : memref<1x8x512xf32, #tpu.memory_space<vmem>>, vector<1x8x32xf32>,
    return
  }
  func.func @transform_0(%arg0: i32, %arg1: i32) -> (i32, i32, i32, i32) {
    %c2_i32 = arith.constant 2 : i32
    %0 = arith.muli %arg0, %c2_i32 : i32
    %1 = arith.addi %0, %arg1 : i32
    %c0_i32 = arith.constant 0 : i32
    %c0_i32_0 = arith.constant 0 : i32
    %c0_i32_1 = arith.constant 0 : i32
    %c0_i32_2 = arith.constant 0 : i32
    return %1, %c0_i32, %c0_i32_0, %c0_i32_1 : i32, i32, i32, i32
  }
  func.func @transform_1(%arg0: i32, %arg1: i32) -> (i32, i32) {
    %c0_i32 = arith.constant 0 : i32
    %c0_i32_0 = arith.constant 0 : i32
    %c0_i32_1 = arith.constant 0 : i32
    return %c0_i32, %c0_i32_0 : i32, i32
  }
  func.func @transform_2(%arg0: i32, %arg1: i32) -> (i32, i32, i32) {
    %c2_i32 = arith.constant 2 : i32
    %0 = arith.muli %arg0, %c2_i32 : i32
    %1 = arith.addi %0, %arg1 : i32
    %c0_i32 = arith.constant 0 : i32
    %c0_i32_0 = arith.constant 0 : i32
    %c0_i32_1 = arith.constant 0 : i32
    return %1, %c0_i32, %c0_i32_0 : i32, i32, i32
  }
}

</mosaic_0001>

<llo_original>
// kernel: tpu_custom_call.1
$region0: #{tpu_custom_call.1}
  #allocation0 [shape = 'u32[]', space=smem, size = 0x4, offset = 0x4, fixed_abs, tag = 'smem constant byte address 0x4 - core index']
  #allocation1 [shape = 'u32[144,128]{1,0:T(1,128)}', space=vmem, size = 0x12000, scoped, tag = 'internal scratch']
  #allocation2 [shape = 'f32[128,36]{1,0:T(8,128)}', space=vmem, size = 0x10000, scoped, tag = 'scratch operand']
  %s0 = inlined_call_operand.vmem [shape: f32[4,10,18,4], index: 0, kind: input, shape index: {}]
  %s1 = inlined_call_operand.vmem [shape: f32[36,32], index: 1, kind: input, shape index: {}]
  %s2 = inlined_call_operand.hbm [shape: f32[4,8,512], index: 2, kind: output, shape index: {}]
  %s3 = sld [smem:[#allocation0]]
  $region41: #{tpu_custom_call.1} parent=0
    _
  %s5 = ssub.s32 1, %s3
  %s6 = scalar_select 0, %s5, %s3
  $region1: #{tpu_custom_call.1} parent=0
    #allocation3 [shape = 'u8[32768]{0}', space=vmem, size = 0x8000, scoped, tag = 'output window, operand 0']
    #allocation4 [shape = 's32[2]{0}', space=sflag, size = 0x8, scoped, tag = 'scoped memory for tpu_custom_call.1']
    %7 = vsyncpa [#allocation4], 0
    %s8 = scalar_lea.sflag [#allocation4], 1
    %9 = vsyncpa %s8, 0
    loop: start=0, step=1, limit=6
    $region2: #{tpu_custom_call.1} parent=1 // loop_pre_header
      _
    $region3: #{tpu_custom_call.1} parent=1 // loop_header
      %s11 = sphi 0, %s15
      %p12 = scmp.ge.s32.totalorder %s11, 6
      %s18 = sphi 0, %s30
      %s19 = sphi 0, %s26
      %s20 = sphi 0, %s18
      %s21 = sphi 0, %s19
      %s22 = sphi 0, %s20
      %s23 = sphi 0, %s21
      %s37 = sphi 0, %s39
      %s40 = sphi 0, %s37
      %s41 = sphi 0, %s40
      %s57 = sphi 0, %s41
      %s61 = sphi 0, %s61
      %s63 = sphi 0, %s61
      %s64 = sphi 0, %s63
      %s78 = sphi 0, %s64
      %s88 = sphi 0, %s90
      %s91 = sphi 0, %s88
      %s92 = sphi 0, %s91
      %s108 = sphi 0, %s92
    $region4: #{tpu_custom_call.1} parent=1 // loop_header_branch
      %14 = sbr.rel (%p12) target = $region8
    $region5: #{tpu_custom_call.1} parent=1 // loop_body
      %s16 = ssub.s32 %s11, 1
      %s17 = ssub.s32 %s11, 2
      %s24 = sadd.s32 1, %s19
      %p25 = scmp.ge.s32.totalorder %s24, 2
      %s26 = scalar_select %p25, 0, %s24
      %s27 = sadd.s32 1, %s18
      %s28 = scalar_select %p25, %s27, %s18
      %p29 = scmp.ge.s32.totalorder %s28, 2
      %s30 = scalar_select %p29, 0, %s28
      %s31 = smul.u32 %s18, 2
      %s32 = sadd.s32 %s31, %s19
      %s33 = smul.u32 %s30, 2
      %s34 = sadd.s32 %s33, %s26
      %s35 = ssub.s32 %s32, %s34
      %p36 = scmp.eq.s32.totalorder %s35, 0
      %s38 = sadd.s32 %s37, 1
      %s39 = scalar_select %p36, %s37, %s38
      %p42 = pneg %p36
      %p43 = scmp.eq.s32.totalorder %s11, 3
      %p44 = por %p42, %p43
      %p45 = scmp.ne.s32.totalorder %s37, %s40
      %p46 = scmp.eq.s32.totalorder %s11, 0
      %p47 = por %p45, %p46
      %p48 = scmp.ne.s32.totalorder %s37, %s40
      %p49 = scmp.eq.s32.totalorder %s16, 3
      %p50 = por %p48, %p49
      %p51 = scmp.ne.s32.totalorder %s40, %s41
      %p52 = scmp.eq.s32.totalorder %s16, 0
      %p53 = por %p51, %p52
      %p54 = scmp.ne.s32.totalorder %s40, %s41
      %p55 = scmp.eq.s32.totalorder %s17, 3
      %p56 = por %p54, %p55
      %p58 = scmp.ne.s32.totalorder %s41, %s57
      %p59 = scmp.eq.s32.totalorder %s17, 0
      %p60 = por %p58, %p59
      %s62 = sadd.s32 %s61, 1
      %p65 = scmp.eq.s32.totalorder %s11, 3
      %p66 = scmp.ne.s32.totalorder %s61, %s63
      %p67 = scmp.eq.s32.totalorder %s11, 0
      %p68 = por %p66, %p67
      %p69 = scmp.ne.s32.totalorder %s61, %s63
      %p70 = scmp.eq.s32.totalorder %s16, 3
      %p71 = por %p69, %p70
      %p72 = scmp.ne.s32.totalorder %s63, %s64
      %p73 = scmp.eq.s32.totalorder %s16, 0
      %p74 = por %p72, %p73
      %p75 = scmp.ne.s32.totalorder %s63, %s64
      %p76 = scmp.eq.s32.totalorder %s17, 3
      %p77 = por %p75, %p76
      %p79 = scmp.ne.s32.totalorder %s64, %s78
      %p80 = scmp.eq.s32.totalorder %s17, 0
      %p81 = por %p79, %p80
      %s82 = smul.u32 %s18, 2
      %s83 = sadd.s32 %s82, %s19
      %s84 = smul.u32 %s30, 2
      %s85 = sadd.s32 %s84, %s26
      %s86 = ssub.s32 %s83, %s85
      %p87 = scmp.eq.s32.totalorder %s86, 0
      %s89 = sadd.s32 %s88, 1
      %s90 = scalar_select %p87, %s88, %s89
      %p93 = pneg %p87
      %p94 = scmp.eq.s32.totalorder %s11, 3
      %p95 = por %p93, %p94
      %p96 = scmp.ne.s32.totalorder %s88, %s91
      %p97 = scmp.eq.s32.totalorder %s11, 0
      %p98 = por %p96, %p97
      %p99 = scmp.ne.s32.totalorder %s88, %s91
      %p100 = scmp.eq.s32.totalorder %s16, 3
      %p101 = por %p99, %p100
      %p102 = scmp.ne.s32.totalorder %s91, %s92
      %p103 = scmp.eq.s32.totalorder %s16, 0
      %p104 = por %p102, %p103
      %p105 = scmp.ne.s32.totalorder %s91, %s92
      %p106 = scmp.eq.s32.totalorder %s17, 3
      %p107 = por %p105, %p106
      %p109 = scmp.ne.s32.totalorder %s92, %s108
      %p110 = scmp.eq.s32.totalorder %s17, 0
      %p111 = por %p109, %p110
      %p112 = scmp.le.s32.totalorder 1, %s11
      %p113 = scmp.lt.s32.totalorder %s11, 5
      %p114 = pnand %p112, %p113
      %p115 = pneg %p114
      // Predicated region
      $region9: #{tpu_custom_call.1} parent=5 // pred_check
        _
      $region10: #{tpu_custom_call.1} parent=5 // pred_check_branch
        %117 = sbr.rel (%p114) target = $region12
      $region11: #{tpu_custom_call.1} parent=5 // pred_region
        %s118 = ssub.s32 %s11, 1
        // Predicated region
        $region13: #{tpu_custom_call.1} parent=11 // pred_check
          %p119 = pneg %p74
        $region14: #{tpu_custom_call.1} parent=11 // pred_check_branch
          %121 = sbr.rel (%p119) target = $region16
        $region15: #{tpu_custom_call.1} parent=11 // pred_region
          _
        $region16: #{tpu_custom_call.1} parent=11 // pred_fallthru
          _
      $region12: #{tpu_custom_call.1} parent=5 // pred_fallthru
        _
      %p122 = scmp.lt.s32.totalorder %s11, 4
      // Predicated region
      $region17: #{tpu_custom_call.1} parent=5 // pred_check
        %p123 = pneg %p122
      $region18: #{tpu_custom_call.1} parent=5 // pred_check_branch
        %125 = sbr.rel (%p123) target = $region20
      $region19: #{tpu_custom_call.1} parent=5 // pred_region
        // Predicated region
        $region21: #{tpu_custom_call.1} parent=19 // pred_check
          %p126 = pneg %p47
        $region22: #{tpu_custom_call.1} parent=19 // pred_check_branch
          %128 = sbr.rel (%p126) target = $region24
        $region23: #{tpu_custom_call.1} parent=19 // pred_region
          %s129 = smul.u32 %s18, 2
          %s130 = sadd.s32 %s129, %s19
          %p131 = scmp.lt.s32.totalorder %s130, 3
          %s132 = scalar_select %p131, %s130, 3
          %s133 = smul.addr %s132, 30
          %s134 = smul.addr %s133, 8
          %s135 = scalar_lea.vmem %s0, %s134
          %s136 = smul.u32 %s18, 2
          %s137 = sadd.s32 %s136, %s19
        $region24: #{tpu_custom_call.1} parent=19 // pred_fallthru
          _
      $region20: #{tpu_custom_call.1} parent=5 // pred_fallthru
        _
      %p138 = scmp.le.s32.totalorder 1, %s11
      %p139 = scmp.lt.s32.totalorder %s11, 5
      %p140 = pnand %p138, %p139
      %p141 = pneg %p140
      // Predicated region
      $region25: #{tpu_custom_call.1} parent=5 // pred_check
        _
      $region26: #{tpu_custom_call.1} parent=5 // pred_check_branch
        %143 = sbr.rel (%p140) target = $region28
      $region27: #{tpu_custom_call.1} parent=5 // pred_region
        %s144 = ssub.s32 %s11, 1
        %s145 = smul.u32 %s20, 2
        %s146 = sadd.s32 %s145, %s21
        %p147 = scmp.lt.s32.totalorder %s146, 3
        %s148 = scalar_select %p147, %s146, 3
        %s149 = smul.addr %s148, 30
        %s150 = smul.addr %s149, 8
        %s151 = scalar_lea.vmem %s0, %s150
        %p152 = pneg %p53
        %p153 = pneg %p50
        %p154 = pneg %p74
        %p155 = pneg %p71
        %p156 = pneg %p104
        %p157 = pneg %p101
        %s158 = sand.u32 %s91, 1
        %s159 = scalar_lea.sflag [#allocation4], %s158
        %s160 = sand.u32 %s91, 1
        %s161 = smul.addr %s160, 32
        %s162 = scalar_lea.vmem [#allocation3], %s161
        %s163 = smul.u32 %s20, 2
        %s164 = sadd.s32 %s163, %s21
        %p165 = scmp.lt.s32.totalorder %s164, 3
        %s166 = scalar_select %p165, %s164, 3
        %s167 = smul.addr %s166, 30
        %s168 = smul.addr %s167, 8
        %s169 = scalar_lea.vmem %s0, %s168
        %s170 = smul.u32 %s20, 2
        %s171 = sadd.s32 %s170, %s21
        %s172 = smul.u32 %s20, 2
        %s173 = sadd.s32 %s172, %s21
        %v174 = vld [vmem:[%s169] sm:$0xff]
        %v175 = vld [vmem:[%s169 + $0x8] sm:$0xff]
        %v176 = vld [vmem:[%s169 + $0x18] sm:$0xff]
        %v177 = vld [vmem:[%s169 + $0x20] sm:$0xff]
        %v178 = vld [vmem:[%s169 + $0x30] sm:$0xff]
        %v179 = vld [vmem:[%s169 + $0x38] sm:$0xff]
        %v180 = vld [vmem:[%s169 + $0x48] sm:$0xff]
        %v181 = vld [vmem:[%s169 + $0x50] sm:$0xff]
        %v182 = vld [vmem:[%s169 + $0x60] sm:$0xff]
        %v183 = vld [vmem:[%s169 + $0x68] sm:$0xff]
        %v184 = vld [vmem:[%s169 + $0x78] sm:$0xff]
        %v185 = vld [vmem:[%s169 + $0x80] sm:$0xff]
        %v186 = vld [vmem:[%s169 + $0x90] sm:$0xff]
        %v187 = vld [vmem:[%s169 + $0x98] sm:$0xff]
        %v188 = vld [vmem:[%s169 + $0xa8] sm:$0xff]
        %v189 = vld [vmem:[%s169 + $0xb0] sm:$0xff]
        %vm190 = vcmask 31744
        %191 = vst.msk [vmem:[#allocation2] sm:$0xff] %vm190, %v174
        %192 = vst.msk [vmem:[#allocation2 + $0x8] sm:$0xff] %vm190, %v175
        %193 = vst.msk [vmem:[#allocation2 + $0x10] sm:$0xff] %vm190, %v176
        %194 = vst.msk [vmem:[#allocation2 + $0x18] sm:$0xff] %vm190, %v177
        %195 = vst.msk [vmem:[#allocation2 + $0x20] sm:$0xff] %vm190, %v178
        %196 = vst.msk [vmem:[#allocation2 + $0x28] sm:$0xff] %vm190, %v179
        %197 = vst.msk [vmem:[#allocation2 + $0x30] sm:$0xff] %vm190, %v180
        %198 = vst.msk [vmem:[#allocation2 + $0x38] sm:$0xff] %vm190, %v181
        %199 = vst.msk [vmem:[#allocation2 + $0x40] sm:$0xff] %vm190, %v182
        %200 = vst.msk [vmem:[#allocation2 + $0x48] sm:$0xff] %vm190, %v183
        %201 = vst.msk [vmem:[#allocation2 + $0x50] sm:$0xff] %vm190, %v184
        %202 = vst.msk [vmem:[#allocation2 + $0x58] sm:$0xff] %vm190, %v185
        %203 = vst.msk [vmem:[#allocation2 + $0x60] sm:$0xff] %vm190, %v186
        %204 = vst.msk [vmem:[#allocation2 + $0x68] sm:$0xff] %vm190, %v187
        %205 = vst.msk [vmem:[#allocation2 + $0x70] sm:$0xff] %vm190, %v188
        %206 = vst.msk [vmem:[#allocation2 + $0x78] sm:$0xff] %vm190, %v189
        %v207 = vld [vmem:[%s169 + $0x1] sm:$0xff]
        %v208 = vld [vmem:[%s169 + $0x9] sm:$0xff]
        %v209 = vld [vmem:[%s169 + $0x19] sm:$0xff]
        %v210 = vld [vmem:[%s169 + $0x21] sm:$0xff]
        %v211 = vld [vmem:[%s169 + $0x31] sm:$0xff]
        %v212 = vld [vmem:[%s169 + $0x39] sm:$0xff]
        %v213 = vld [vmem:[%s169 + $0x49] sm:$0xff]
        %v214 = vld [vmem:[%s169 + $0x51] sm:$0xff]
        %v215 = vld [vmem:[%s169 + $0x61] sm:$0xff]
        %v216 = vld [vmem:[%s169 + $0x69] sm:$0xff]
        %v217 = vld [vmem:[%s169 + $0x79] sm:$0xff]
        %v218 = vld [vmem:[%s169 + $0x81] sm:$0xff]
        %v219 = vld [vmem:[%s169 + $0x91] sm:$0xff]
        %v220 = vld [vmem:[%s169 + $0x99] sm:$0xff]
        %v221 = vld [vmem:[%s169 + $0xa9] sm:$0xff]
        %v222 = vld [vmem:[%s169 + $0xb1] sm:$0xff]
        %239 = vrot.lane.b32.xlu0 %v207, 4
        %v240 = vpop.permute.xlu0 %239
        %241 = vrot.lane.b32.xlu0 %v208, 4
        %v242 = vpop.permute.xlu0 %241
        %243 = vrot.lane.b32.xlu0 %v209, 4
        %v244 = vpop.permute.xlu0 %243
        %245 = vrot.lane.b32.xlu0 %v210, 4
        %v246 = vpop.permute.xlu0 %245
        %247 = vrot.lane.b32.xlu0 %v211, 4
        %v248 = vpop.permute.xlu0 %247
        %249 = vrot.lane.b32.xlu0 %v212, 4
        %v250 = vpop.permute.xlu0 %249
        %251 = vrot.lane.b32.xlu0 %v213, 4
        %v252 = vpop.permute.xlu0 %251
        %253 = vrot.lane.b32.xlu0 %v214, 4
        %v254 = vpop.permute.xlu0 %253
        %255 = vrot.lane.b32.xlu0 %v215, 4
        %v256 = vpop.permute.xlu0 %255
        %257 = vrot.lane.b32.xlu0 %v216, 4
        %v258 = vpop.permute.xlu0 %257
        %259 = vrot.lane.b32.xlu0 %v217, 4
        %v260 = vpop.permute.xlu0 %259
        %261 = vrot.lane.b32.xlu0 %v218, 4
        %v262 = vpop.permute.xlu0 %261
        %263 = vrot.lane.b32.xlu0 %v219, 4
        %v264 = vpop.permute.xlu0 %263
        %265 = vrot.lane.b32.xlu0 %v220, 4
        %v266 = vpop.permute.xlu0 %265
        %267 = vrot.lane.b32.xlu0 %v221, 4
        %v268 = vpop.permute.xlu0 %267
        %269 = vrot.lane.b32.xlu0 %v222, 4
        %v270 = vpop.permute.xlu0 %269
        %vm287 = vcmask 64544
        %288 = vst.msk [vmem:[#allocation2] sm:$0xff] %vm287, %v240
        %289 = vst.msk [vmem:[#allocation2 + $0x8] sm:$0xff] %vm287, %v242
        %290 = vst.msk [vmem:[#allocation2 + $0x10] sm:$0xff] %vm287, %v244
        %291 = vst.msk [vmem:[#allocation2 + $0x18] sm:$0xff] %vm287, %v246
        %292 = vst.msk [vmem:[#allocation2 + $0x20] sm:$0xff] %vm287, %v248
        %293 = vst.msk [vmem:[#allocation2 + $0x28] sm:$0xff] %vm287, %v250
        %294 = vst.msk [vmem:[#allocation2 + $0x30] sm:$0xff] %vm287, %v252
        %295 = vst.msk [vmem:[#allocation2 + $0x38] sm:$0xff] %vm287, %v254
        %296 = vst.msk [vmem:[#allocation2 + $0x40] sm:$0xff] %vm287, %v256
        %297 = vst.msk [vmem:[#allocation2 + $0x48] sm:$0xff] %vm287, %v258
        %298 = vst.msk [vmem:[#allocation2 + $0x50] sm:$0xff] %vm287, %v260
        %299 = vst.msk [vmem:[#allocation2 + $0x58] sm:$0xff] %vm287, %v262
        %300 = vst.msk [vmem:[#allocation2 + $0x60] sm:$0xff] %vm287, %v264
        %301 = vst.msk [vmem:[#allocation2 + $0x68] sm:$0xff] %vm287, %v266
        %302 = vst.msk [vmem:[#allocation2 + $0x70] sm:$0xff] %vm287, %v268
        %303 = vst.msk [vmem:[#allocation2 + $0x78] sm:$0xff] %vm287, %v270
        %v304 = vld [vmem:[%s169 + $0x2] sm:$0xff]
        %v305 = vld [vmem:[%s169 + $0xa] sm:$0xff]
        %v306 = vld [vmem:[%s169 + $0x1a] sm:$0xff]
        %v307 = vld [vmem:[%s169 + $0x22] sm:$0xff]
        %v308 = vld [vmem:[%s169 + $0x32] sm:$0xff]
        %v309 = vld [vmem:[%s169 + $0x3a] sm:$0xff]
        %v310 = vld [vmem:[%s169 + $0x4a] sm:$0xff]
        %v311 = vld [vmem:[%s169 + $0x52] sm:$0xff]
        %v312 = vld [vmem:[%s169 + $0x62] sm:$0xff]
        %v313 = vld [vmem:[%s169 + $0x6a] sm:$0xff]
        %v314 = vld [vmem:[%s169 + $0x7a] sm:$0xff]
        %v315 = vld [vmem:[%s169 + $0x82] sm:$0xff]
        %v316 = vld [vmem:[%s169 + $0x92] sm:$0xff]
        %v317 = vld [vmem:[%s169 + $0x9a] sm:$0xff]
        %v318 = vld [vmem:[%s169 + $0xaa] sm:$0xff]
        %v319 = vld [vmem:[%s169 + $0xb2] sm:$0xff]
        %336 = vrot.lane.b32.xlu0 %v304, 8
        %v337 = vpop.permute.xlu0 %336
        %338 = vrot.lane.b32.xlu0 %v305, 8
        %v339 = vpop.permute.xlu0 %338
        %340 = vrot.lane.b32.xlu0 %v306, 8
        %v341 = vpop.permute.xlu0 %340
        %342 = vrot.lane.b32.xlu0 %v307, 8
        %v343 = vpop.permute.xlu0 %342
        %344 = vrot.lane.b32.xlu0 %v308, 8
        %v345 = vpop.permute.xlu0 %344
        %346 = vrot.lane.b32.xlu0 %v309, 8
        %v347 = vpop.permute.xlu0 %346
        %348 = vrot.lane.b32.xlu0 %v310, 8
        %v349 = vpop.permute.xlu0 %348
        %350 = vrot.lane.b32.xlu0 %v311, 8
        %v351 = vpop.permute.xlu0 %350
        %352 = vrot.lane.b32.xlu0 %v312, 8
        %v353 = vpop.permute.xlu0 %352
        %354 = vrot.lane.b32.xlu0 %v313, 8
        %v355 = vpop.permute.xlu0 %354
        %356 = vrot.lane.b32.xlu0 %v314, 8
        %v357 = vpop.permute.xlu0 %356
        %358 = vrot.lane.b32.xlu0 %v315, 8
        %v359 = vpop.permute.xlu0 %358
        %360 = vrot.lane.b32.xlu0 %v316, 8
        %v361 = vpop.permute.xlu0 %360
        %362 = vrot.lane.b32.xlu0 %v317, 8
        %v363 = vpop.permute.xlu0 %362
        %364 = vrot.lane.b32.xlu0 %v318, 8
        %v365 = vpop.permute.xlu0 %364
        %366 = vrot.lane.b32.xlu0 %v319, 8
        %v367 = vpop.permute.xlu0 %366
        %vm384 = vcmask 97344
        %385 = vst.msk [vmem:[#allocation2] sm:$0xff] %vm384, %v337
        %386 = vst.msk [vmem:[#allocation2 + $0x8] sm:$0xff] %vm384, %v339
        %387 = vst.msk [vmem:[#allocation2 + $0x10] sm:$0xff] %vm384, %v341
        %388 = vst.msk [vmem:[#allocation2 + $0x18] sm:$0xff] %vm384, %v343
        %389 = vst.msk [vmem:[#allocation2 + $0x20] sm:$0xff] %vm384, %v345
        %390 = vst.msk [vmem:[#allocation2 + $0x28] sm:$0xff] %vm384, %v347
        %391 = vst.msk [vmem:[#allocation2 + $0x30] sm:$0xff] %vm384, %v349
        %392 = vst.msk [vmem:[#allocation2 + $0x38] sm:$0xff] %vm384, %v351
        %393 = vst.msk [vmem:[#allocation2 + $0x40] sm:$0xff] %vm384, %v353
        %394 = vst.msk [vmem:[#allocation2 + $0x48] sm:$0xff] %vm384, %v355
        %395 = vst.msk [vmem:[#allocation2 + $0x50] sm:$0xff] %vm384, %v357
        %396 = vst.msk [vmem:[#allocation2 + $0x58] sm:$0xff] %vm384, %v359
        %397 = vst.msk [vmem:[#allocation2 + $0x60] sm:$0xff] %vm384, %v361
        %398 = vst.msk [vmem:[#allocation2 + $0x68] sm:$0xff] %vm384, %v363
        %399 = vst.msk [vmem:[#allocation2 + $0x70] sm:$0xff] %vm384, %v365
        %400 = vst.msk [vmem:[#allocation2 + $0x78] sm:$0xff] %vm384, %v367
        %s401 = scalar_lea.vmem %s169, 24
        %v402 = vld [vmem:[%s401] sm:$0xff]
        %v403 = vld [vmem:[%s401 + $0x8] sm:$0xff]
        %v404 = vld [vmem:[%s401 + $0x18] sm:$0xff]
        %v405 = vld [vmem:[%s401 + $0x20] sm:$0xff]
        %v406 = vld [vmem:[%s401 + $0x30] sm:$0xff]
        %v407 = vld [vmem:[%s401 + $0x38] sm:$0xff]
        %v408 = vld [vmem:[%s401 + $0x48] sm:$0xff]
        %v409 = vld [vmem:[%s401 + $0x50] sm:$0xff]
        %v410 = vld [vmem:[%s401 + $0x60] sm:$0xff]
        %v411 = vld [vmem:[%s401 + $0x68] sm:$0xff]
        %v412 = vld [vmem:[%s401 + $0x78] sm:$0xff]
        %v413 = vld [vmem:[%s401 + $0x80] sm:$0xff]
        %v414 = vld [vmem:[%s401 + $0x90] sm:$0xff]
        %v415 = vld [vmem:[%s401 + $0x98] sm:$0xff]
        %v416 = vld [vmem:[%s401 + $0xa8] sm:$0xff]
        %v417 = vld [vmem:[%s401 + $0xb0] sm:$0xff]
        %434 = vrot.lane.b32.xlu0 %v402, 12
        %v435 = vpop.permute.xlu0 %434
        %436 = vrot.lane.b32.xlu0 %v403, 12
        %v437 = vpop.permute.xlu0 %436
        %438 = vrot.lane.b32.xlu0 %v404, 12
        %v439 = vpop.permute.xlu0 %438
        %440 = vrot.lane.b32.xlu0 %v405, 12
        %v441 = vpop.permute.xlu0 %440
        %442 = vrot.lane.b32.xlu0 %v406, 12
        %v443 = vpop.permute.xlu0 %442
        %444 = vrot.lane.b32.xlu0 %v407, 12
        %v445 = vpop.permute.xlu0 %444
        %446 = vrot.lane.b32.xlu0 %v408, 12
        %v447 = vpop.permute.xlu0 %446
        %448 = vrot.lane.b32.xlu0 %v409, 12
        %v449 = vpop.permute.xlu0 %448
        %450 = vrot.lane.b32.xlu0 %v410, 12
        %v451 = vpop.permute.xlu0 %450
        %452 = vrot.lane.b32.xlu0 %v411, 12
        %v453 = vpop.permute.xlu0 %452
        %454 = vrot.lane.b32.xlu0 %v412, 12
        %v455 = vpop.permute.xlu0 %454
        %456 = vrot.lane.b32.xlu0 %v413, 12
        %v457 = vpop.permute.xlu0 %456
        %458 = vrot.lane.b32.xlu0 %v414, 12
        %v459 = vpop.permute.xlu0 %458
        %460 = vrot.lane.b32.xlu0 %v415, 12
        %v461 = vpop.permute.xlu0 %460
        %462 = vrot.lane.b32.xlu0 %v416, 12
        %v463 = vpop.permute.xlu0 %462
        %464 = vrot.lane.b32.xlu0 %v417, 12
        %v465 = vpop.permute.xlu0 %464
        %vm482 = vcmask 130144
        %483 = vst.msk [vmem:[#allocation2] sm:$0xff] %vm482, %v435
        %484 = vst.msk [vmem:[#allocation2 + $0x8] sm:$0xff] %vm482, %v437
        %485 = vst.msk [vmem:[#allocation2 + $0x10] sm:$0xff] %vm482, %v439
        %486 = vst.msk [vmem:[#allocation2 + $0x18] sm:$0xff] %vm482, %v441
        %487 = vst.msk [vmem:[#allocation2 + $0x20] sm:$0xff] %vm482, %v443
        %488 = vst.msk [vmem:[#allocation2 + $0x28] sm:$0xff] %vm482, %v445
        %489 = vst.msk [vmem:[#allocation2 + $0x30] sm:$0xff] %vm482, %v447
        %490 = vst.msk [vmem:[#allocation2 + $0x38] sm:$0xff] %vm482, %v449
        %491 = vst.msk [vmem:[#allocation2 + $0x40] sm:$0xff] %vm482, %v451
        %492 = vst.msk [vmem:[#allocation2 + $0x48] sm:$0xff] %vm482, %v453
        %493 = vst.msk [vmem:[#allocation2 + $0x50] sm:$0xff] %vm482, %v455
        %494 = vst.msk [vmem:[#allocation2 + $0x58] sm:$0xff] %vm482, %v457
        %495 = vst.msk [vmem:[#allocation2 + $0x60] sm:$0xff] %vm482, %v459
        %496 = vst.msk [vmem:[#allocation2 + $0x68] sm:$0xff] %vm482, %v461
        %497 = vst.msk [vmem:[#allocation2 + $0x70] sm:$0xff] %vm482, %v463
        %498 = vst.msk [vmem:[#allocation2 + $0x78] sm:$0xff] %vm482, %v465
        %v499 = vld [vmem:[%s401 + $0x1] sm:$0xff]
        %v500 = vld [vmem:[%s401 + $0x9] sm:$0xff]
        %v501 = vld [vmem:[%s401 + $0x19] sm:$0xff]
        %v502 = vld [vmem:[%s401 + $0x21] sm:$0xff]
        %v503 = vld [vmem:[%s401 + $0x31] sm:$0xff]
        %v504 = vld [vmem:[%s401 + $0x39] sm:$0xff]
        %v505 = vld [vmem:[%s401 + $0x49] sm:$0xff]
        %v506 = vld [vmem:[%s401 + $0x51] sm:$0xff]
        %v507 = vld [vmem:[%s401 + $0x61] sm:$0xff]
        %v508 = vld [vmem:[%s401 + $0x69] sm:$0xff]
        %v509 = vld [vmem:[%s401 + $0x79] sm:$0xff]
        %v510 = vld [vmem:[%s401 + $0x81] sm:$0xff]
        %v511 = vld [vmem:[%s401 + $0x91] sm:$0xff]
        %v512 = vld [vmem:[%s401 + $0x99] sm:$0xff]
        %v513 = vld [vmem:[%s401 + $0xa9] sm:$0xff]
        %v514 = vld [vmem:[%s401 + $0xb1] sm:$0xff]
        %531 = vrot.lane.b32.xlu0 %v499, 16
        %v532 = vpop.permute.xlu0 %531
        %533 = vrot.lane.b32.xlu0 %v500, 16
        %v534 = vpop.permute.xlu0 %533
        %535 = vrot.lane.b32.xlu0 %v501, 16
        %v536 = vpop.permute.xlu0 %535
        %537 = vrot.lane.b32.xlu0 %v502, 16
        %v538 = vpop.permute.xlu0 %537
        %539 = vrot.lane.b32.xlu0 %v503, 16
        %v540 = vpop.permute.xlu0 %539
        %541 = vrot.lane.b32.xlu0 %v504, 16
        %v542 = vpop.permute.xlu0 %541
        %543 = vrot.lane.b32.xlu0 %v505, 16
        %v544 = vpop.permute.xlu0 %543
        %545 = vrot.lane.b32.xlu0 %v506, 16
        %v546 = vpop.permute.xlu0 %545
        %547 = vrot.lane.b32.xlu0 %v507, 16
        %v548 = vpop.permute.xlu0 %547
        %549 = vrot.lane.b32.xlu0 %v508, 16
        %v550 = vpop.permute.xlu0 %549
        %551 = vrot.lane.b32.xlu0 %v509, 16
        %v552 = vpop.permute.xlu0 %551
        %553 = vrot.lane.b32.xlu0 %v510, 16
        %v554 = vpop.permute.xlu0 %553
        %555 = vrot.lane.b32.xlu0 %v511, 16
        %v556 = vpop.permute.xlu0 %555
        %557 = vrot.lane.b32.xlu0 %v512, 16
        %v558 = vpop.permute.xlu0 %557
        %559 = vrot.lane.b32.xlu0 %v513, 16
        %v560 = vpop.permute.xlu0 %559
        %561 = vrot.lane.b32.xlu0 %v514, 16
        %v562 = vpop.permute.xlu0 %561
        %vm579 = vcmask 162944
        %580 = vst.msk [vmem:[#allocation2] sm:$0xff] %vm579, %v532
        %581 = vst.msk [vmem:[#allocation2 + $0x8] sm:$0xff] %vm579, %v534
        %582 = vst.msk [vmem:[#allocation2 + $0x10] sm:$0xff] %vm579, %v536
        %583 = vst.msk [vmem:[#allocation2 + $0x18] sm:$0xff] %vm579, %v538
        %584 = vst.msk [vmem:[#allocation2 + $0x20] sm:$0xff] %vm579, %v540
        %585 = vst.msk [vmem:[#allocation2 + $0x28] sm:$0xff] %vm579, %v542
        %586 = vst.msk [vmem:[#allocation2 + $0x30] sm:$0xff] %vm579, %v544
        %587 = vst.msk [vmem:[#allocation2 + $0x38] sm:$0xff] %vm579, %v546
        %588 = vst.msk [vmem:[#allocation2 + $0x40] sm:$0xff] %vm579, %v548
        %589 = vst.msk [vmem:[#allocation2 + $0x48] sm:$0xff] %vm579, %v550
        %590 = vst.msk [vmem:[#allocation2 + $0x50] sm:$0xff] %vm579, %v552
        %591 = vst.msk [vmem:[#allocation2 + $0x58] sm:$0xff] %vm579, %v554
        %592 = vst.msk [vmem:[#allocation2 + $0x60] sm:$0xff] %vm579, %v556
        %593 = vst.msk [vmem:[#allocation2 + $0x68] sm:$0xff] %vm579, %v558
        %594 = vst.msk [vmem:[#allocation2 + $0x70] sm:$0xff] %vm579, %v560
        %595 = vst.msk [vmem:[#allocation2 + $0x78] sm:$0xff] %vm579, %v562
        %v596 = vld [vmem:[%s401 + $0x2] sm:$0xff]
        %v597 = vld [vmem:[%s401 + $0xa] sm:$0xff]
        %v598 = vld [vmem:[%s401 + $0x1a] sm:$0xff]
        %v599 = vld [vmem:[%s401 + $0x22] sm:$0xff]
        %v600 = vld [vmem:[%s401 + $0x32] sm:$0xff]
        %v601 = vld [vmem:[%s401 + $0x3a] sm:$0xff]
        %v602 = vld [vmem:[%s401 + $0x4a] sm:$0xff]
        %v603 = vld [vmem:[%s401 + $0x52] sm:$0xff]
        %v604 = vld [vmem:[%s401 + $0x62] sm:$0xff]
        %v605 = vld [vmem:[%s401 + $0x6a] sm:$0xff]
        %v606 = vld [vmem:[%s401 + $0x7a] sm:$0xff]
        %v607 = vld [vmem:[%s401 + $0x82] sm:$0xff]
        %v608 = vld [vmem:[%s401 + $0x92] sm:$0xff]
        %v609 = vld [vmem:[%s401 + $0x9a] sm:$0xff]
        %v610 = vld [vmem:[%s401 + $0xaa] sm:$0xff]
        %v611 = vld [vmem:[%s401 + $0xb2] sm:$0xff]
        %628 = vrot.lane.b32.xlu0 %v596, 20
        %v629 = vpop.permute.xlu0 %628
        %630 = vrot.lane.b32.xlu0 %v597, 20
        %v631 = vpop.permute.xlu0 %630
        %632 = vrot.lane.b32.xlu0 %v598, 20
        %v633 = vpop.permute.xlu0 %632
        %634 = vrot.lane.b32.xlu0 %v599, 20
        %v635 = vpop.permute.xlu0 %634
        %636 = vrot.lane.b32.xlu0 %v600, 20
        %v637 = vpop.permute.xlu0 %636
        %638 = vrot.lane.b32.xlu0 %v601, 20
        %v639 = vpop.permute.xlu0 %638
        %640 = vrot.lane.b32.xlu0 %v602, 20
        %v641 = vpop.permute.xlu0 %640
        %642 = vrot.lane.b32.xlu0 %v603, 20
        %v643 = vpop.permute.xlu0 %642
        %644 = vrot.lane.b32.xlu0 %v604, 20
        %v645 = vpop.permute.xlu0 %644
        %646 = vrot.lane.b32.xlu0 %v605, 20
        %v647 = vpop.permute.xlu0 %646
        %648 = vrot.lane.b32.xlu0 %v606, 20
        %v649 = vpop.permute.xlu0 %648
        %650 = vrot.lane.b32.xlu0 %v607, 20
        %v651 = vpop.permute.xlu0 %650
        %652 = vrot.lane.b32.xlu0 %v608, 20
        %v653 = vpop.permute.xlu0 %652
        %654 = vrot.lane.b32.xlu0 %v609, 20
        %v655 = vpop.permute.xlu0 %654
        %656 = vrot.lane.b32.xlu0 %v610, 20
        %v657 = vpop.permute.xlu0 %656
        %658 = vrot.lane.b32.xlu0 %v611, 20
        %v659 = vpop.permute.xlu0 %658
        %vm676 = vcmask 195744
        %677 = vst.msk [vmem:[#allocation2] sm:$0xff] %vm676, %v629
        %678 = vst.msk [vmem:[#allocation2 + $0x8] sm:$0xff] %vm676, %v631
        %679 = vst.msk [vmem:[#allocation2 + $0x10] sm:$0xff] %vm676, %v633
        %680 = vst.msk [vmem:[#allocation2 + $0x18] sm:$0xff] %vm676, %v635
        %681 = vst.msk [vmem:[#allocation2 + $0x20] sm:$0xff] %vm676, %v637
        %682 = vst.msk [vmem:[#allocation2 + $0x28] sm:$0xff] %vm676, %v639
        %683 = vst.msk [vmem:[#allocation2 + $0x30] sm:$0xff] %vm676, %v641
        %684 = vst.msk [vmem:[#allocation2 + $0x38] sm:$0xff] %vm676, %v643
        %685 = vst.msk [vmem:[#allocation2 + $0x40] sm:$0xff] %vm676, %v645
        %686 = vst.msk [vmem:[#allocation2 + $0x48] sm:$0xff] %vm676, %v647
        %687 = vst.msk [vmem:[#allocation2 + $0x50] sm:$0xff] %vm676, %v649
        %688 = vst.msk [vmem:[#allocation2 + $0x58] sm:$0xff] %vm676, %v651
        %689 = vst.msk [vmem:[#allocation2 + $0x60] sm:$0xff] %vm676, %v653
        %690 = vst.msk [vmem:[#allocation2 + $0x68] sm:$0xff] %vm676, %v655
        %691 = vst.msk [vmem:[#allocation2 + $0x70] sm:$0xff] %vm676, %v657
        %692 = vst.msk [vmem:[#allocation2 + $0x78] sm:$0xff] %vm676, %v659
        %s693 = scalar_lea.vmem %s169, 48
        %v694 = vld [vmem:[%s693] sm:$0xff]
        %v695 = vld [vmem:[%s693 + $0x8] sm:$0xff]
        %v696 = vld [vmem:[%s693 + $0x18] sm:$0xff]
        %v697 = vld [vmem:[%s693 + $0x20] sm:$0xff]
        %v698 = vld [vmem:[%s693 + $0x30] sm:$0xff]
        %v699 = vld [vmem:[%s693 + $0x38] sm:$0xff]
        %v700 = vld [vmem:[%s693 + $0x48] sm:$0xff]
        %v701 = vld [vmem:[%s693 + $0x50] sm:$0xff]
        %v702 = vld [vmem:[%s693 + $0x60] sm:$0xff]
        %v703 = vld [vmem:[%s693 + $0x68] sm:$0xff]
        %v704 = vld [vmem:[%s693 + $0x78] sm:$0xff]
        %v705 = vld [vmem:[%s693 + $0x80] sm:$0xff]
        %v706 = vld [vmem:[%s693 + $0x90] sm:$0xff]
        %v707 = vld [vmem:[%s693 + $0x98] sm:$0xff]
        %v708 = vld [vmem:[%s693 + $0xa8] sm:$0xff]
        %v709 = vld [vmem:[%s693 + $0xb0] sm:$0xff]
        %726 = vrot.lane.b32.xlu0 %v694, 24
        %v727 = vpop.permute.xlu0 %726
        %728 = vrot.lane.b32.xlu0 %v695, 24
        %v729 = vpop.permute.xlu0 %728
        %730 = vrot.lane.b32.xlu0 %v696, 24
        %v731 = vpop.permute.xlu0 %730
        %732 = vrot.lane.b32.xlu0 %v697, 24
        %v733 = vpop.permute.xlu0 %732
        %734 = vrot.lane.b32.xlu0 %v698, 24
        %v735 = vpop.permute.xlu0 %734
        %736 = vrot.lane.b32.xlu0 %v699, 24
        %v737 = vpop.permute.xlu0 %736
        %738 = vrot.lane.b32.xlu0 %v700, 24
        %v739 = vpop.permute.xlu0 %738
        %740 = vrot.lane.b32.xlu0 %v701, 24
        %v741 = vpop.permute.xlu0 %740
        %742 = vrot.lane.b32.xlu0 %v702, 24
        %v743 = vpop.permute.xlu0 %742
        %744 = vrot.lane.b32.xlu0 %v703, 24
        %v745 = vpop.permute.xlu0 %744
        %746 = vrot.lane.b32.xlu0 %v704, 24
        %v747 = vpop.permute.xlu0 %746
        %748 = vrot.lane.b32.xlu0 %v705, 24
        %v749 = vpop.permute.xlu0 %748
        %750 = vrot.lane.b32.xlu0 %v706, 24
        %v751 = vpop.permute.xlu0 %750
        %752 = vrot.lane.b32.xlu0 %v707, 24
        %v753 = vpop.permute.xlu0 %752
        %754 = vrot.lane.b32.xlu0 %v708, 24
        %v755 = vpop.permute.xlu0 %754
        %756 = vrot.lane.b32.xlu0 %v709, 24
        %v757 = vpop.permute.xlu0 %756
        %vm774 = vcmask 228544
        %775 = vst.msk [vmem:[#allocation2] sm:$0xff] %vm774, %v727
        %776 = vst.msk [vmem:[#allocation2 + $0x8] sm:$0xff] %vm774, %v729
        %777 = vst.msk [vmem:[#allocation2 + $0x10] sm:$0xff] %vm774, %v731
        %778 = vst.msk [vmem:[#allocation2 + $0x18] sm:$0xff] %vm774, %v733
        %779 = vst.msk [vmem:[#allocation2 + $0x20] sm:$0xff] %vm774, %v735
        %780 = vst.msk [vmem:[#allocation2 + $0x28] sm:$0xff] %vm774, %v737
        %781 = vst.msk [vmem:[#allocation2 + $0x30] sm:$0xff] %vm774, %v739
        %782 = vst.msk [vmem:[#allocation2 + $0x38] sm:$0xff] %vm774, %v741
        %783 = vst.msk [vmem:[#allocation2 + $0x40] sm:$0xff] %vm774, %v743
        %784 = vst.msk [vmem:[#allocation2 + $0x48] sm:$0xff] %vm774, %v745
        %785 = vst.msk [vmem:[#allocation2 + $0x50] sm:$0xff] %vm774, %v747
        %786 = vst.msk [vmem:[#allocation2 + $0x58] sm:$0xff] %vm774, %v749
        %787 = vst.msk [vmem:[#allocation2 + $0x60] sm:$0xff] %vm774, %v751
        %788 = vst.msk [vmem:[#allocation2 + $0x68] sm:$0xff] %vm774, %v753
        %789 = vst.msk [vmem:[#allocation2 + $0x70] sm:$0xff] %vm774, %v755
        %790 = vst.msk [vmem:[#allocation2 + $0x78] sm:$0xff] %vm774, %v757
        %v791 = vld [vmem:[%s693 + $0x1] sm:$0xff]
        %v792 = vld [vmem:[%s693 + $0x9] sm:$0xff]
        %v793 = vld [vmem:[%s693 + $0x19] sm:$0xff]
        %v794 = vld [vmem:[%s693 + $0x21] sm:$0xff]
        %v795 = vld [vmem:[%s693 + $0x31] sm:$0xff]
        %v796 = vld [vmem:[%s693 + $0x39] sm:$0xff]
        %v797 = vld [vmem:[%s693 + $0x49] sm:$0xff]
        %v798 = vld [vmem:[%s693 + $0x51] sm:$0xff]
        %v799 = vld [vmem:[%s693 + $0x61] sm:$0xff]
        %v800 = vld [vmem:[%s693 + $0x69] sm:$0xff]
        %v801 = vld [vmem:[%s693 + $0x79] sm:$0xff]
        %v802 = vld [vmem:[%s693 + $0x81] sm:$0xff]
        %v803 = vld [vmem:[%s693 + $0x91] sm:$0xff]
        %v804 = vld [vmem:[%s693 + $0x99] sm:$0xff]
        %v805 = vld [vmem:[%s693 + $0xa9] sm:$0xff]
        %v806 = vld [vmem:[%s693 + $0xb1] sm:$0xff]
        %823 = vrot.lane.b32.xlu0 %v791, 28
        %v824 = vpop.permute.xlu0 %823
        %825 = vrot.lane.b32.xlu0 %v792, 28
        %v826 = vpop.permute.xlu0 %825
        %827 = vrot.lane.b32.xlu0 %v793, 28
        %v828 = vpop.permute.xlu0 %827
        %829 = vrot.lane.b32.xlu0 %v794, 28
        %v830 = vpop.permute.xlu0 %829
        %831 = vrot.lane.b32.xlu0 %v795, 28
        %v832 = vpop.permute.xlu0 %831
        %833 = vrot.lane.b32.xlu0 %v796, 28
        %v834 = vpop.permute.xlu0 %833
        %835 = vrot.lane.b32.xlu0 %v797, 28
        %v836 = vpop.permute.xlu0 %835
        %837 = vrot.lane.b32.xlu0 %v798, 28
        %v838 = vpop.permute.xlu0 %837
        %839 = vrot.lane.b32.xlu0 %v799, 28
        %v840 = vpop.permute.xlu0 %839
        %841 = vrot.lane.b32.xlu0 %v800, 28
        %v842 = vpop.permute.xlu0 %841
        %843 = vrot.lane.b32.xlu0 %v801, 28
        %v844 = vpop.permute.xlu0 %843
        %845 = vrot.lane.b32.xlu0 %v802, 28
        %v846 = vpop.permute.xlu0 %845
        %847 = vrot.lane.b32.xlu0 %v803, 28
        %v848 = vpop.permute.xlu0 %847
        %849 = vrot.lane.b32.xlu0 %v804, 28
        %v850 = vpop.permute.xlu0 %849
        %851 = vrot.lane.b32.xlu0 %v805, 28
        %v852 = vpop.permute.xlu0 %851
        %853 = vrot.lane.b32.xlu0 %v806, 28
        %v854 = vpop.permute.xlu0 %853
        %vm871 = vcmask 261344
        %872 = vst.msk [vmem:[#allocation2] sm:$0xff] %vm871, %v824
        %873 = vst.msk [vmem:[#allocation2 + $0x8] sm:$0xff] %vm871, %v826
        %874 = vst.msk [vmem:[#allocation2 + $0x10] sm:$0xff] %vm871, %v828
        %875 = vst.msk [vmem:[#allocation2 + $0x18] sm:$0xff] %vm871, %v830
        %876 = vst.msk [vmem:[#allocation2 + $0x20] sm:$0xff] %vm871, %v832
        %877 = vst.msk [vmem:[#allocation2 + $0x28] sm:$0xff] %vm871, %v834
        %878 = vst.msk [vmem:[#allocation2 + $0x30] sm:$0xff] %vm871, %v836
        %879 = vst.msk [vmem:[#allocation2 + $0x38] sm:$0xff] %vm871, %v838
        %880 = vst.msk [vmem:[#allocation2 + $0x40] sm:$0xff] %vm871, %v840
        %881 = vst.msk [vmem:[#allocation2 + $0x48] sm:$0xff] %vm871, %v842
        %882 = vst.msk [vmem:[#allocation2 + $0x50] sm:$0xff] %vm871, %v844
        %883 = vst.msk [vmem:[#allocation2 + $0x58] sm:$0xff] %vm871, %v846
        %884 = vst.msk [vmem:[#allocation2 + $0x60] sm:$0xff] %vm871, %v848
        %885 = vst.msk [vmem:[#allocation2 + $0x68] sm:$0xff] %vm871, %v850
        %886 = vst.msk [vmem:[#allocation2 + $0x70] sm:$0xff] %vm871, %v852
        %887 = vst.msk [vmem:[#allocation2 + $0x78] sm:$0xff] %vm871, %v854
        %v888 = vld [vmem:[%s693 + $0x2] sm:$0xff]
        %v889 = vld [vmem:[%s693 + $0xa] sm:$0xff]
        %v890 = vld [vmem:[%s693 + $0x1a] sm:$0xff]
        %v891 = vld [vmem:[%s693 + $0x22] sm:$0xff]
        %v892 = vld [vmem:[%s693 + $0x32] sm:$0xff]
        %v893 = vld [vmem:[%s693 + $0x3a] sm:$0xff]
        %v894 = vld [vmem:[%s693 + $0x4a] sm:$0xff]
        %v895 = vld [vmem:[%s693 + $0x52] sm:$0xff]
        %v896 = vld [vmem:[%s693 + $0x62] sm:$0xff]
        %v897 = vld [vmem:[%s693 + $0x6a] sm:$0xff]
        %v898 = vld [vmem:[%s693 + $0x7a] sm:$0xff]
        %v899 = vld [vmem:[%s693 + $0x82] sm:$0xff]
        %v900 = vld [vmem:[%s693 + $0x92] sm:$0xff]
        %v901 = vld [vmem:[%s693 + $0x9a] sm:$0xff]
        %v902 = vld [vmem:[%s693 + $0xaa] sm:$0xff]
        %v903 = vld [vmem:[%s693 + $0xb2] sm:$0xff]
        %920 = vrot.lane.b32.xlu0 %v888, 32
        %v921 = vpop.permute.xlu0 %920
        %922 = vrot.lane.b32.xlu0 %v889, 32
        %v923 = vpop.permute.xlu0 %922
        %924 = vrot.lane.b32.xlu0 %v890, 32
        %v925 = vpop.permute.xlu0 %924
        %926 = vrot.lane.b32.xlu0 %v891, 32
        %v927 = vpop.permute.xlu0 %926
        %928 = vrot.lane.b32.xlu0 %v892, 32
        %v929 = vpop.permute.xlu0 %928
        %930 = vrot.lane.b32.xlu0 %v893, 32
        %v931 = vpop.permute.xlu0 %930
        %932 = vrot.lane.b32.xlu0 %v894, 32
        %v933 = vpop.permute.xlu0 %932
        %934 = vrot.lane.b32.xlu0 %v895, 32
        %v935 = vpop.permute.xlu0 %934
        %936 = vrot.lane.b32.xlu0 %v896, 32
        %v937 = vpop.permute.xlu0 %936
        %938 = vrot.lane.b32.xlu0 %v897, 32
        %v939 = vpop.permute.xlu0 %938
        %940 = vrot.lane.b32.xlu0 %v898, 32
        %v941 = vpop.permute.xlu0 %940
        %942 = vrot.lane.b32.xlu0 %v899, 32
        %v943 = vpop.permute.xlu0 %942
        %944 = vrot.lane.b32.xlu0 %v900, 32
        %v945 = vpop.permute.xlu0 %944
        %946 = vrot.lane.b32.xlu0 %v901, 32
        %v947 = vpop.permute.xlu0 %946
        %948 = vrot.lane.b32.xlu0 %v902, 32
        %v949 = vpop.permute.xlu0 %948
        %950 = vrot.lane.b32.xlu0 %v903, 32
        %v951 = vpop.permute.xlu0 %950
        %vm968 = vcmask 294144
        %969 = vst.msk [vmem:[#allocation2] sm:$0xff] %vm968, %v921
        %970 = vst.msk [vmem:[#allocation2 + $0x8] sm:$0xff] %vm968, %v923
        %971 = vst.msk [vmem:[#allocation2 + $0x10] sm:$0xff] %vm968, %v925
        %972 = vst.msk [vmem:[#allocation2 + $0x18] sm:$0xff] %vm968, %v927
        %973 = vst.msk [vmem:[#allocation2 + $0x20] sm:$0xff] %vm968, %v929
        %974 = vst.msk [vmem:[#allocation2 + $0x28] sm:$0xff] %vm968, %v931
        %975 = vst.msk [vmem:[#allocation2 + $0x30] sm:$0xff] %vm968, %v933
        %976 = vst.msk [vmem:[#allocation2 + $0x38] sm:$0xff] %vm968, %v935
        %977 = vst.msk [vmem:[#allocation2 + $0x40] sm:$0xff] %vm968, %v937
        %978 = vst.msk [vmem:[#allocation2 + $0x48] sm:$0xff] %vm968, %v939
        %979 = vst.msk [vmem:[#allocation2 + $0x50] sm:$0xff] %vm968, %v941
        %980 = vst.msk [vmem:[#allocation2 + $0x58] sm:$0xff] %vm968, %v943
        %981 = vst.msk [vmem:[#allocation2 + $0x60] sm:$0xff] %vm968, %v945
        %982 = vst.msk [vmem:[#allocation2 + $0x68] sm:$0xff] %vm968, %v947
        %983 = vst.msk [vmem:[#allocation2 + $0x70] sm:$0xff] %vm968, %v949
        %984 = vst.msk [vmem:[#allocation2 + $0x78] sm:$0xff] %vm968, %v951
        %v985 = vld [vmem:[#allocation2] sm:$0xff]
        %v986 = vld [vmem:[#allocation2 + $0x8] sm:$0xff]
        %v987 = vld [vmem:[#allocation2 + $0x10] sm:$0xff]
        %v988 = vld [vmem:[#allocation2 + $0x18] sm:$0xff]
        %v989 = vld [vmem:[#allocation2 + $0x20] sm:$0xff]
        %v990 = vld [vmem:[#allocation2 + $0x28] sm:$0xff]
        %v991 = vld [vmem:[#allocation2 + $0x30] sm:$0xff]
        %v992 = vld [vmem:[#allocation2 + $0x38] sm:$0xff]
        %v993 = vld [vmem:[#allocation2 + $0x40] sm:$0xff]
        %v994 = vld [vmem:[#allocation2 + $0x48] sm:$0xff]
        %v995 = vld [vmem:[#allocation2 + $0x50] sm:$0xff]
        %v996 = vld [vmem:[#allocation2 + $0x58] sm:$0xff]
        %v997 = vld [vmem:[#allocation2 + $0x60] sm:$0xff]
        %v998 = vld [vmem:[#allocation2 + $0x68] sm:$0xff]
        %v999 = vld [vmem:[#allocation2 + $0x70] sm:$0xff]
        %v1000 = vld [vmem:[#allocation2 + $0x78] sm:$0xff]
        %v1001 = vld [vmem:[%s1] sm:$0xff]
        %v1002 = vld [vmem:[%s1 + $0x8] sm:$0xff]
        %v1003 = vld [vmem:[%s1 + $0x10] sm:$0xff]
        %v1004 = vld [vmem:[%s1 + $0x18] sm:$0xff]
        %v1005 = vld [vmem:[%s1 + $0x20] sm:$0xf]
        %vm1006 = vcmask 293888
        %v1008 = vsel %vm1006, %v985, 0
        %v1011 = vsel %vm1006, %v986, 0
        %v1014 = vsel %vm1006, %v987, 0
        %v1017 = vsel %vm1006, %v988, 0
        %v1020 = vsel %vm1006, %v989, 0
        %v1023 = vsel %vm1006, %v990, 0
        %v1026 = vsel %vm1006, %v991, 0
        %v1029 = vsel %vm1006, %v992, 0
        %v1032 = vsel %vm1006, %v993, 0
        %v1035 = vsel %vm1006, %v994, 0
        %v1038 = vsel %vm1006, %v995, 0
        %v1041 = vsel %vm1006, %v996, 0
        %v1044 = vsel %vm1006, %v997, 0
        %v1047 = vsel %vm1006, %v998, 0
        %v1050 = vsel %vm1006, %v999, 0
        %v1053 = vsel %vm1006, %v1000, 0
        %vm1055 = vcmask 1043456
        %v1057 = vsel %vm1055, %v1005, 0
        %1059 = vmatprep.subr.mxu0 0.0
        %1060 = vmatpush1.msra.mxu0 0.0
        %1061 = vmatprep.subr.mxu0 0.0
        %1062 = vmatpush1.msra.mxu0 0.0
        %1063 = vmatprep.subr.mxu0 0.0
        %1064 = vmatpush1.msra.mxu0 0.0
        %1065 = vmatprep.subr.mxu0 0.0
        %1066 = vmatpush1.msra.mxu0 0.0
        %1067 = vmatprep.subr.mxu0 0.0
        %1068 = vmatpush1.msra.mxu0 0.0
        %1069 = vmatprep.subr.mxu0 0.0
        %1070 = vmatpush1.msra.mxu0 0.0
        %1071 = vmatprep.subr.mxu0 0.0
        %1072 = vmatpush1.msra.mxu0 0.0
        %1073 = vmatprep.subr.mxu0 0.0
        %1074 = vmatpush1.msra.mxu0 0.0
        %1075 = vmatprep.subr.mxu0 0.0
        %1076 = vmatpush1.msra.mxu0 0.0
        %1077 = vmatprep.subr.mxu0 0.0
        %1078 = vmatpush1.msra.mxu0 0.0
        %1079 = vmatprep.subr.mxu0 0.0
        %1080 = vmatpush1.msra.mxu0 0.0
        %1081 = vmatprep.subr.mxu0 0.0
        %1082 = vmatpush1.msra.mxu0 %v1057
        %1083 = vmatprep.subr.mxu0 0.0
        %1084 = vmatpush1.msra.mxu0 %v1004
        %1085 = vmatprep.subr.mxu0 0.0
        %1086 = vmatpush1.msra.mxu0 %v1003
        %1087 = vmatprep.subr.mxu0 0.0
        %1088 = vmatpush1.msra.mxu0 %v1002
        %1089 = vmatprep.subr.mxu0 0.0
        %1090 = vmatpush1.msra.mxu0 %v1001
        %1091 = vmatprep.subr.mxu0 0.0
        %1092 = vmatpush2.msra.mxu0 0.0
        %1093 = vmatprep.subr.mxu0 0.0
        %1094 = vmatpush2.msra.mxu0 0.0
        %1095 = vmatprep.subr.mxu0 0.0
        %1096 = vmatpush2.msra.mxu0 0.0
        %1097 = vmatprep.subr.mxu0 0.0
        %1098 = vmatpush2.msra.mxu0 0.0
        %1099 = vmatprep.subr.mxu0 0.0
        %1100 = vmatpush2.msra.mxu0 0.0
        %1101 = vmatprep.subr.mxu0 0.0
        %1102 = vmatpush2.msra.mxu0 0.0
        %1103 = vmatprep.subr.mxu0 0.0
        %1104 = vmatpush2.msra.mxu0 0.0
        %1105 = vmatprep.subr.mxu0 0.0
        %1106 = vmatpush2.msra.mxu0 0.0
        %1107 = vmatprep.subr.mxu0 0.0
        %1108 = vmatpush2.msra.mxu0 0.0
        %1109 = vmatprep.subr.mxu0 0.0
        %1110 = vmatpush2.msra.mxu0 0.0
        %1111 = vmatprep.subr.mxu0 0.0
        %1112 = vmatpush2.msra.mxu0 0.0
        %1113 = vmatprep.subr.mxu0 0.0
        %1114 = vmatpush2.msra.mxu0 0.0
        %1115 = vmatprep.subr.mxu0 0.0
        %1116 = vmatpush2.msra.mxu0 0.0
        %1117 = vmatprep.subr.mxu0 0.0
        %1118 = vmatpush2.msra.mxu0 0.0
        %1119 = vmatprep.subr.mxu0 0.0
        %1120 = vmatpush2.msra.mxu0 0.0
        %1121 = vmatprep.subr.mxu0 0.0
        %1122 = vmatpush2.msra.mxu0 0.0
        %1123 = vmatprep.mubr.f32.mxu0 0.0
        %1124 = vmatmul.mubr.f32.gmra.mxu0 %v1008
        %v1125 = vpop.f32.mrf.mxu0
        %v1126 = vadd.f32 0.0, %v1125
        %v1127 = vpop.f32.mrf.mxu0
        %1128 = vmatprep.mubr.f32.mxu0 0.0
        %1129 = vmatmul.mubr.f32.gmra.mxu0 %v1011
        %v1130 = vpop.f32.mrf.mxu0
        %v1131 = vadd.f32 0.0, %v1130
        %v1132 = vpop.f32.mrf.mxu0
        %1133 = vmatprep.mubr.f32.mxu0 0.0
        %1134 = vmatmul.mubr.f32.gmra.mxu0 %v1014
        %v1135 = vpop.f32.mrf.mxu0
        %v1136 = vadd.f32 0.0, %v1135
        %v1137 = vpop.f32.mrf.mxu0
        %1138 = vmatprep.mubr.f32.mxu0 0.0
        %1139 = vmatmul.mubr.f32.gmra.mxu0 %v1017
        %v1140 = vpop.f32.mrf.mxu0
        %v1141 = vadd.f32 0.0, %v1140
        %v1142 = vpop.f32.mrf.mxu0
        %1143 = vmatprep.mubr.f32.mxu0 0.0
        %1144 = vmatmul.mubr.f32.gmra.mxu0 %v1020
        %v1145 = vpop.f32.mrf.mxu0
        %v1146 = vadd.f32 0.0, %v1145
        %v1147 = vpop.f32.mrf.mxu0
        %1148 = vmatprep.mubr.f32.mxu0 0.0
        %1149 = vmatmul.mubr.f32.gmra.mxu0 %v1023
        %v1150 = vpop.f32.mrf.mxu0
        %v1151 = vadd.f32 0.0, %v1150
        %v1152 = vpop.f32.mrf.mxu0
        %1153 = vmatprep.mubr.f32.mxu0 0.0
        %1154 = vmatmul.mubr.f32.gmra.mxu0 %v1026
        %v1155 = vpop.f32.mrf.mxu0
        %v1156 = vadd.f32 0.0, %v1155
        %v1157 = vpop.f32.mrf.mxu0
        %1158 = vmatprep.mubr.f32.mxu0 0.0
        %1159 = vmatmul.mubr.f32.gmra.mxu0 %v1029
        %v1160 = vpop.f32.mrf.mxu0
        %v1161 = vadd.f32 0.0, %v1160
        %v1162 = vpop.f32.mrf.mxu0
        %1163 = vmatprep.mubr.f32.mxu0 0.0
        %1164 = vmatmul.mubr.f32.gmra.mxu0 %v1032
        %v1165 = vpop.f32.mrf.mxu0
        %v1166 = vadd.f32 0.0, %v1165
        %v1167 = vpop.f32.mrf.mxu0
        %1168 = vmatprep.mubr.f32.mxu0 0.0
        %1169 = vmatmul.mubr.f32.gmra.mxu0 %v1035
        %v1170 = vpop.f32.mrf.mxu0
        %v1171 = vadd.f32 0.0, %v1170
        %v1172 = vpop.f32.mrf.mxu0
        %1173 = vmatprep.mubr.f32.mxu0 0.0
        %1174 = vmatmul.mubr.f32.gmra.mxu0 %v1038
        %v1175 = vpop.f32.mrf.mxu0
        %v1176 = vadd.f32 0.0, %v1175
        %v1177 = vpop.f32.mrf.mxu0
        %1178 = vmatprep.mubr.f32.mxu0 0.0
        %1179 = vmatmul.mubr.f32.gmra.mxu0 %v1041
        %v1180 = vpop.f32.mrf.mxu0
        %v1181 = vadd.f32 0.0, %v1180
        %v1182 = vpop.f32.mrf.mxu0
        %1183 = vmatprep.mubr.f32.mxu0 0.0
        %1184 = vmatmul.mubr.f32.gmra.mxu0 %v1044
        %v1185 = vpop.f32.mrf.mxu0
        %v1186 = vadd.f32 0.0, %v1185
        %v1187 = vpop.f32.mrf.mxu0
        %1188 = vmatprep.mubr.f32.mxu0 0.0
        %1189 = vmatmul.mubr.f32.gmra.mxu0 %v1047
        %v1190 = vpop.f32.mrf.mxu0
        %v1191 = vadd.f32 0.0, %v1190
        %v1192 = vpop.f32.mrf.mxu0
        %1193 = vmatprep.mubr.f32.mxu0 0.0
        %1194 = vmatmul.mubr.f32.gmra.mxu0 %v1050
        %v1195 = vpop.f32.mrf.mxu0
        %v1196 = vadd.f32 0.0, %v1195
        %v1197 = vpop.f32.mrf.mxu0
        %1198 = vmatprep.mubr.f32.mxu0 0.0
        %1199 = vmatmul.mubr.f32.gmra.mxu0 %v1053
        %v1200 = vpop.f32.mrf.mxu0
        %v1201 = vadd.f32 0.0, %v1200
        %v1202 = vpop.f32.mrf.mxu0
        %1203 = vdwg.mxu0
        %v1212 = vrot.slane %v1136, 7
        %vm1213 = vcmask 1041409
        %v1214 = vsel %vm1213, %v1212, %v1126
        %v1215 = vrot.slane %v1146, 6
        %vm1216 = vcmask 1042434
        %v1217 = vsel %vm1216, %v1215, %v1214
        %v1218 = vrot.slane %v1156, 5
        %vm1219 = vcmask 1043459
        %v1220 = vsel %vm1219, %v1218, %v1217
        %v1221 = vrot.slane %v1166, 4
        %vm1222 = vcmask 1044484
        %v1223 = vsel %vm1222, %v1221, %v1220
        %v1224 = vrot.slane %v1176, 3
        %vm1225 = vcmask 1045509
        %v1226 = vsel %vm1225, %v1224, %v1223
        %v1227 = vrot.slane %v1186, 2
        %vm1228 = vcmask 1046534
        %v1229 = vsel %vm1228, %v1227, %v1226
        %v1230 = vrot.slane %v1196, 1
        %vm1231 = vcmask 1047559
        %v1232 = vsel %vm1231, %v1230, %v1229
        %vm1234 = vcmask 261120
        %1235 = vst.msk [vmem:[%s162] sm:$0xff] %vm1234, %v1232
        %v1236 = vrot.slane %v1126, 1
        %v1237 = vsel %vm1213, %v1136, %v1236
        %v1238 = vrot.slane %v1146, 7
        %v1239 = vsel %vm1216, %v1238, %v1237
        %v1240 = vrot.slane %v1156, 6
        %v1241 = vsel %vm1219, %v1240, %v1239
        %v1242 = vrot.slane %v1166, 5
        %v1243 = vsel %vm1222, %v1242, %v1241
        %v1244 = vrot.slane %v1176, 4
        %v1245 = vsel %vm1225, %v1244, %v1243
        %v1246 = vrot.slane %v1186, 3
        %v1247 = vsel %vm1228, %v1246, %v1245
        %v1248 = vrot.slane %v1196, 2
        %v1249 = vsel %vm1231, %v1248, %v1247
        %1250 = vrot.lane.b32.xlu0 %v1249, 32
        %v1251 = vpop.permute.xlu0 %1250
        %vm1253 = vcmask 523520
        %1254 = vst.msk [vmem:[%s162] sm:$0xff] %vm1253, %v1251
        %v1255 = vrot.slane %v1126, 2
        %v1256 = vrot.slane %v1136, 1
        %v1257 = vsel %vm1213, %v1256, %v1255
        %v1258 = vsel %vm1216, %v1146, %v1257
        %v1259 = vrot.slane %v1156, 7
        %v1260 = vsel %vm1219, %v1259, %v1258
        %v1261 = vrot.slane %v1166, 6
        %v1262 = vsel %vm1222, %v1261, %v1260
        %v1263 = vrot.slane %v1176, 5
        %v1264 = vsel %vm1225, %v1263, %v1262
        %v1265 = vrot.slane %v1186, 4
        %v1266 = vsel %vm1228, %v1265, %v1264
        %v1267 = vrot.slane %v1196, 3
        %v1268 = vsel %vm1231, %v1267, %v1266
        %1269 = vrot.lane.b32.xlu0 %v1268, 64
        %v1270 = vpop.permute.xlu0 %1269
        %vm1272 = vcmask 785920
        %1273 = vst.msk [vmem:[%s162] sm:$0xff] %vm1272, %v1270
        %v1274 = vrot.slane %v1126, 3
        %v1275 = vrot.slane %v1136, 2
        %v1276 = vsel %vm1213, %v1275, %v1274
        %v1277 = vrot.slane %v1146, 1
        %v1278 = vsel %vm1216, %v1277, %v1276
        %v1279 = vsel %vm1219, %v1156, %v1278
        %v1280 = vrot.slane %v1166, 7
        %v1281 = vsel %vm1222, %v1280, %v1279
        %v1282 = vrot.slane %v1176, 6
        %v1283 = vsel %vm1225, %v1282, %v1281
        %v1284 = vrot.slane %v1186, 5
        %v1285 = vsel %vm1228, %v1284, %v1283
        %v1286 = vrot.slane %v1196, 4
        %v1287 = vsel %vm1231, %v1286, %v1285
        %1288 = vrot.lane.b32.xlu0 %v1287, 96
        %v1289 = vpop.permute.xlu0 %1288
        %vm1291 = vcmask 1048320
        %1292 = vst.msk [vmem:[%s162] sm:$0xff] %vm1291, %v1289
        %v1293 = vrot.slane %v1126, 4
        %v1294 = vrot.slane %v1136, 3
        %v1295 = vsel %vm1213, %v1294, %v1293
        %v1296 = vrot.slane %v1146, 2
        %v1297 = vsel %vm1216, %v1296, %v1295
        %v1298 = vrot.slane %v1156, 1
        %v1299 = vsel %vm1219, %v1298, %v1297
        %v1300 = vsel %vm1222, %v1166, %v1299
        %v1301 = vrot.slane %v1176, 7
        %v1302 = vsel %vm1225, %v1301, %v1300
        %v1303 = vrot.slane %v1186, 6
        %v1304 = vsel %vm1228, %v1303, %v1302
        %v1305 = vrot.slane %v1196, 5
        %v1306 = vsel %vm1231, %v1305, %v1304
        %1308 = vst.msk [vmem:[%s162 + $0x8] sm:$0xff] %vm1234, %v1306
        %v1309 = vrot.slane %v1126, 5
        %v1310 = vrot.slane %v1136, 4
        %v1311 = vsel %vm1213, %v1310, %v1309
        %v1312 = vrot.slane %v1146, 3
        %v1313 = vsel %vm1216, %v1312, %v1311
        %v1314 = vrot.slane %v1156, 2
        %v1315 = vsel %vm1219, %v1314, %v1313
        %v1316 = vrot.slane %v1166, 1
        %v1317 = vsel %vm1222, %v1316, %v1315
        %v1318 = vsel %vm1225, %v1176, %v1317
        %v1319 = vrot.slane %v1186, 7
        %v1320 = vsel %vm1228, %v1319, %v1318
        %v1321 = vrot.slane %v1196, 6
        %v1322 = vsel %vm1231, %v1321, %v1320
        %1323 = vrot.lane.b32.xlu0 %v1322, 32
        %v1324 = vpop.permute.xlu0 %1323
        %1326 = vst.msk [vmem:[%s162 + $0x8] sm:$0xff] %vm1253, %v1324
        %v1327 = vrot.slane %v1126, 6
        %v1328 = vrot.slane %v1136, 5
        %v1329 = vsel %vm1213, %v1328, %v1327
        %v1330 = vrot.slane %v1146, 4
        %v1331 = vsel %vm1216, %v1330, %v1329
        %v1332 = vrot.slane %v1156, 3
        %v1333 = vsel %vm1219, %v1332, %v1331
        %v1334 = vrot.slane %v1166, 2
        %v1335 = vsel %vm1222, %v1334, %v1333
        %v1336 = vrot.slane %v1176, 1
        %v1337 = vsel %vm1225, %v1336, %v1335
        %v1338 = vsel %vm1228, %v1186, %v1337
        %v1339 = vrot.slane %v1196, 7
        %v1340 = vsel %vm1231, %v1339, %v1338
        %1341 = vrot.lane.b32.xlu0 %v1340, 64
        %v1342 = vpop.permute.xlu0 %1341
        %1344 = vst.msk [vmem:[%s162 + $0x8] sm:$0xff] %vm1272, %v1342
        %v1345 = vrot.slane %v1126, 7
        %v1346 = vrot.slane %v1136, 6
        %v1347 = vsel %vm1213, %v1346, %v1345
        %v1348 = vrot.slane %v1146, 5
        %v1349 = vsel %vm1216, %v1348, %v1347
        %v1350 = vrot.slane %v1156, 4
        %v1351 = vsel %vm1219, %v1350, %v1349
        %v1352 = vrot.slane %v1166, 3
        %v1353 = vsel %vm1222, %v1352, %v1351
        %v1354 = vrot.slane %v1176, 2
        %v1355 = vsel %vm1225, %v1354, %v1353
        %v1356 = vrot.slane %v1186, 1
        %v1357 = vsel %vm1228, %v1356, %v1355
        %v1358 = vsel %vm1231, %v1196, %v1357
        %1359 = vrot.lane.b32.xlu0 %v1358, 96
        %v1360 = vpop.permute.xlu0 %1359
        %1362 = vst.msk [vmem:[%s162 + $0x8] sm:$0xff] %vm1291, %v1360
        %v1371 = vrot.slane %v1141, 7
        %v1372 = vsel %vm1213, %v1371, %v1131
        %v1373 = vrot.slane %v1151, 6
        %v1374 = vsel %vm1216, %v1373, %v1372
        %v1375 = vrot.slane %v1161, 5
        %v1376 = vsel %vm1219, %v1375, %v1374
        %v1377 = vrot.slane %v1171, 4
        %v1378 = vsel %vm1222, %v1377, %v1376
        %v1379 = vrot.slane %v1181, 3
        %v1380 = vsel %vm1225, %v1379, %v1378
        %v1381 = vrot.slane %v1191, 2
        %v1382 = vsel %vm1228, %v1381, %v1380
        %v1383 = vrot.slane %v1201, 1
        %v1384 = vsel %vm1231, %v1383, %v1382
        %1386 = vst.msk [vmem:[%s162 + $0x10] sm:$0xff] %vm1234, %v1384
        %v1387 = vrot.slane %v1131, 1
        %v1388 = vsel %vm1213, %v1141, %v1387
        %v1389 = vrot.slane %v1151, 7
        %v1390 = vsel %vm1216, %v1389, %v1388
        %v1391 = vrot.slane %v1161, 6
        %v1392 = vsel %vm1219, %v1391, %v1390
        %v1393 = vrot.slane %v1171, 5
        %v1394 = vsel %vm1222, %v1393, %v1392
        %v1395 = vrot.slane %v1181, 4
        %v1396 = vsel %vm1225, %v1395, %v1394
        %v1397 = vrot.slane %v1191, 3
        %v1398 = vsel %vm1228, %v1397, %v1396
        %v1399 = vrot.slane %v1201, 2
        %v1400 = vsel %vm1231, %v1399, %v1398
        %1401 = vrot.lane.b32.xlu0 %v1400, 32
        %v1402 = vpop.permute.xlu0 %1401
        %1404 = vst.msk [vmem:[%s162 + $0x10] sm:$0xff] %vm1253, %v1402
        %v1405 = vrot.slane %v1131, 2
        %v1406 = vrot.slane %v1141, 1
        %v1407 = vsel %vm1213, %v1406, %v1405
        %v1408 = vsel %vm1216, %v1151, %v1407
        %v1409 = vrot.slane %v1161, 7
        %v1410 = vsel %vm1219, %v1409, %v1408
        %v1411 = vrot.slane %v1171, 6
        %v1412 = vsel %vm1222, %v1411, %v1410
        %v1413 = vrot.slane %v1181, 5
        %v1414 = vsel %vm1225, %v1413, %v1412
        %v1415 = vrot.slane %v1191, 4
        %v1416 = vsel %vm1228, %v1415, %v1414
        %v1417 = vrot.slane %v1201, 3
        %v1418 = vsel %vm1231, %v1417, %v1416
        %1419 = vrot.lane.b32.xlu0 %v1418, 64
        %v1420 = vpop.permute.xlu0 %1419
        %1422 = vst.msk [vmem:[%s162 + $0x10] sm:$0xff] %vm1272, %v1420
        %v1423 = vrot.slane %v1131, 3
        %v1424 = vrot.slane %v1141, 2
        %v1425 = vsel %vm1213, %v1424, %v1423
        %v1426 = vrot.slane %v1151, 1
        %v1427 = vsel %vm1216, %v1426, %v1425
        %v1428 = vsel %vm1219, %v1161, %v1427
        %v1429 = vrot.slane %v1171, 7
        %v1430 = vsel %vm1222, %v1429, %v1428
        %v1431 = vrot.slane %v1181, 6
        %v1432 = vsel %vm1225, %v1431, %v1430
        %v1433 = vrot.slane %v1191, 5
        %v1434 = vsel %vm1228, %v1433, %v1432
        %v1435 = vrot.slane %v1201, 4
        %v1436 = vsel %vm1231, %v1435, %v1434
        %1437 = vrot.lane.b32.xlu0 %v1436, 96
        %v1438 = vpop.permute.xlu0 %1437
        %1440 = vst.msk [vmem:[%s162 + $0x10] sm:$0xff] %vm1291, %v1438
        %v1441 = vrot.slane %v1131, 4
        %v1442 = vrot.slane %v1141, 3
        %v1443 = vsel %vm1213, %v1442, %v1441
        %v1444 = vrot.slane %v1151, 2
        %v1445 = vsel %vm1216, %v1444, %v1443
        %v1446 = vrot.slane %v1161, 1
        %v1447 = vsel %vm1219, %v1446, %v1445
        %v1448 = vsel %vm1222, %v1171, %v1447
        %v1449 = vrot.slane %v1181, 7
        %v1450 = vsel %vm1225, %v1449, %v1448
        %v1451 = vrot.slane %v1191, 6
        %v1452 = vsel %vm1228, %v1451, %v1450
        %v1453 = vrot.slane %v1201, 5
        %v1454 = vsel %vm1231, %v1453, %v1452
        %1456 = vst.msk [vmem:[%s162 + $0x18] sm:$0xff] %vm1234, %v1454
        %v1457 = vrot.slane %v1131, 5
        %v1458 = vrot.slane %v1141, 4
        %v1459 = vsel %vm1213, %v1458, %v1457
        %v1460 = vrot.slane %v1151, 3
        %v1461 = vsel %vm1216, %v1460, %v1459
        %v1462 = vrot.slane %v1161, 2
        %v1463 = vsel %vm1219, %v1462, %v1461
        %v1464 = vrot.slane %v1171, 1
        %v1465 = vsel %vm1222, %v1464, %v1463
        %v1466 = vsel %vm1225, %v1181, %v1465
        %v1467 = vrot.slane %v1191, 7
        %v1468 = vsel %vm1228, %v1467, %v1466
        %v1469 = vrot.slane %v1201, 6
        %v1470 = vsel %vm1231, %v1469, %v1468
        %1471 = vrot.lane.b32.xlu0 %v1470, 32
        %v1472 = vpop.permute.xlu0 %1471
        %1474 = vst.msk [vmem:[%s162 + $0x18] sm:$0xff] %vm1253, %v1472
        %v1475 = vrot.slane %v1131, 6
        %v1476 = vrot.slane %v1141, 5
        %v1477 = vsel %vm1213, %v1476, %v1475
        %v1478 = vrot.slane %v1151, 4
        %v1479 = vsel %vm1216, %v1478, %v1477
        %v1480 = vrot.slane %v1161, 3
        %v1481 = vsel %vm1219, %v1480, %v1479
        %v1482 = vrot.slane %v1171, 2
        %v1483 = vsel %vm1222, %v1482, %v1481
        %v1484 = vrot.slane %v1181, 1
        %v1485 = vsel %vm1225, %v1484, %v1483
        %v1486 = vsel %vm1228, %v1191, %v1485
        %v1487 = vrot.slane %v1201, 7
        %v1488 = vsel %vm1231, %v1487, %v1486
        %1489 = vrot.lane.b32.xlu0 %v1488, 64
        %v1490 = vpop.permute.xlu0 %1489
        %1492 = vst.msk [vmem:[%s162 + $0x18] sm:$0xff] %vm1272, %v1490
        %v1493 = vrot.slane %v1131, 7
        %v1494 = vrot.slane %v1141, 6
        %v1495 = vsel %vm1213, %v1494, %v1493
        %v1496 = vrot.slane %v1151, 5
        %v1497 = vsel %vm1216, %v1496, %v1495
        %v1498 = vrot.slane %v1161, 4
        %v1499 = vsel %vm1219, %v1498, %v1497
        %v1500 = vrot.slane %v1171, 3
        %v1501 = vsel %vm1222, %v1500, %v1499
        %v1502 = vrot.slane %v1181, 2
        %v1503 = vsel %vm1225, %v1502, %v1501
        %v1504 = vrot.slane %v1191, 1
        %v1505 = vsel %vm1228, %v1504, %v1503
        %v1506 = vsel %vm1231, %v1201, %v1505
        %1507 = vrot.lane.b32.xlu0 %v1506, 96
        %v1508 = vpop.permute.xlu0 %1507
        %1510 = vst.msk [vmem:[%s162 + $0x18] sm:$0xff] %vm1291, %v1508
        %s1511 = sand.u32 %s91, 1
        %s1512 = scalar_lea.sflag [#allocation4], %s1511
        %s1513 = sand.u32 %s91, 1
        %s1514 = smul.addr %s1513, 32
        %s1515 = scalar_lea.vmem [#allocation3], %s1514
        // Predicated region
        $region29: #{tpu_custom_call.1} parent=27 // pred_check
          %p1516 = pneg %p101
        $region30: #{tpu_custom_call.1} parent=27 // pred_check_branch
          %1518 = sbr.rel (%p1516) target = $region32
        $region31: #{tpu_custom_call.1} parent=27 // pred_region
          %s1519 = smul.u32 %s20, 2
          %s1520 = sadd.s32 %s1519, %s21
          %s1522 = ssub.s32 512, 512
          %1523 = vsyncadd %s1512, %s1522
          %s1524 = smul.addr %s1520, 4
          %s1525 = smul.addr %s1524, 128
          %s1526 = scalar_lea.hbm %s2, %s1525
          %s1528 = sshll.u32 %s1515, 4
          %s1529 = int_to_ptr.vmem [resolvable:$true] %s1528
          %1531 = dma.vmem_to_hbm [thread:$0]  %s1529, 512, %s1526, %s1512
        $region32: #{tpu_custom_call.1} parent=27 // pred_fallthru
          _
      $region28: #{tpu_custom_call.1} parent=5 // pred_fallthru
        _
      %p1532 = scmp.le.s32.totalorder 2, %s11
      // Predicated region
      $region33: #{tpu_custom_call.1} parent=5 // pred_check
        %p1533 = pneg %p1532
      $region34: #{tpu_custom_call.1} parent=5 // pred_check_branch
        %1535 = sbr.rel (%p1533) target = $region36
      $region35: #{tpu_custom_call.1} parent=5 // pred_region
        %s1536 = ssub.s32 %s11, 2
        // Predicated region
        $region37: #{tpu_custom_call.1} parent=35 // pred_check
          %p1537 = pneg %p107
        $region38: #{tpu_custom_call.1} parent=35 // pred_check_branch
          %1539 = sbr.rel (%p1537) target = $region40
        $region39: #{tpu_custom_call.1} parent=35 // pred_region
          %s1540 = sand.u32 %s92, 1
          %s1541 = scalar_lea.sflag [#allocation4], %s1540
          %s1542 = sand.u32 %s92, 1
          %s1543 = smul.addr %s1542, 32
          %s1544 = scalar_lea.vmem [#allocation3], %s1543
          %1545 = dma.done %s1541, 512
        $region40: #{tpu_custom_call.1} parent=35 // pred_fallthru
          _
      $region36: #{tpu_custom_call.1} parent=5 // pred_fallthru
        _
    $region6: #{tpu_custom_call.1} parent=1 // loop_footer
      %s15 = sadd.s32 1, %s11
    $region7: #{tpu_custom_call.1} parent=1 // loop_footer_branch
      %10 = sbr.rel target = $region3
    $region8: #{tpu_custom_call.1} parent=1 // loop_exit
      _
    %1546 = vsyncpa [#allocation4], 1
    %s1547 = scalar_lea.sflag [#allocation4], 1
    %1548 = vsyncpa %s1547, 1

</llo_original>
